<compile_context>
chip_gen: v6e
topology: v6e:2x2x1
jax: 0.10.0
libtpu: 0.0.40
codegen_flags: <defaults>
</compile_context>

<pallas_src>
import jax
import jax.numpy as jnp
from jax.experimental import pallas as pl
from jax.experimental.pallas import tpu as pltpu

# ----------------------------- static geometry -----------------------------
K = 4                          # conv kernel size
S = 2                          # conv stride
HD = 16                        # hidden dim (layer-1 channels); layer-2 = 2*HD
H_IN = 28                      # MNIST spatial size
HO1 = (H_IN - K) // S + 1      # 13
HO2 = (HO1 - K) // S + 1       # 5
K1 = K * K                     # layer-1 patch width (C_in == 1) = 16
NPOS = K * K                   # number of layer-2 kernel taps = 16
NVALID = HO2 * HO2             # real layer-2 positions per image = 25
P2B = 32                       # padded positions per image (mult. of 8)
KD = NPOS * K1                 # 256: lane-dense contraction width


# ------------------------------ fused kernel -------------------------------
def _fused_disc_kernel(p1_ref, p1d_ref, w1_ref, wbd_ref, w2f_ref,
                       tmat_ref, wm3_ref, pk_ref, o_ref):
    """All three discriminator blocks fused in one gridless kernel.

    p1_ref   : (~B*169 pad8, 16)  layer-1 im2col patches (BN-1 statistics)
    p1d_ref  : (B*32, 256)        lane-dense layer-2 im2col, cols (tap, kh, kw)
    w1_ref   : (16, 16)           conv1 weight [(kh,kw), c_out]
    wbd_ref  : (256, 256)         kron(I16, w1): block-diagonal conv1 weight
    w2f_ref  : (256, 32)          conv2 weight flattened [(tap, c_in), c_out]
    tmat_ref : (16, 256)          0/1 tiling matrix: channel -> (tap, channel)
    wm3_ref  : (B*32, 32)         conv3 weight scattered on the 5x5 grid,
                                  zero-padded + batch-tiled
    pk_ref   : (5, 32)            packed gamma1 / beta1 / gamma2 / beta2 / bias3
    o_ref    : (B, 1)             discriminator logits
    """
    f32 = jnp.float32
    eps = 1e-5
    slope = 0.2

    rows2 = p1d_ref.shape[0]           # B * 32
    batch = rows2 // P2B               # B
    n1 = batch * HO1 * HO1             # valid BN-1 rows (B * 169)
    n2 = batch * NVALID                # valid BN-2 rows (B * 25)

    # ---- BatchNorm-1 statistics over every (b, h, w) of the conv1 output ---
    # (conv bias skipped: exactly cancelled by the mean subtraction;
    #  zero pad rows contribute exact zeros to the sum)
    y1 = jnp.dot(p1_ref[...], w1_ref[...], preferred_element_type=f32)
    r1 = jax.lax.broadcasted_iota(jnp.int32, (p1_ref.shape[0], 1), 0)
    valid1 = r1 < n1
    m1 = jnp.sum(y1, axis=0, keepdims=True) * (1.0 / n1)              # (1,16)
    c1 = y1 - m1
    v1 = jnp.sum(jnp.where(valid1, c1 * c1, 0.0), axis=0,
                 keepdims=True) * (1.0 / n1)
    s1 = pk_ref[0:1, 0:HD] * jax.lax.rsqrt(v1 + eps)                  # gamma/std
    sh1 = pk_ref[1:2, 0:HD] - m1 * s1                                 # beta - m*s

    # Tile the per-channel affine 16 -> 256 lanes (tap-major) with one tiny
    # MXU matmul against the 0/1 tiling matrix (no in-kernel relayout).
    ss = jnp.dot(jnp.concatenate([s1, sh1], axis=0), tmat_ref[...],
                 preferred_element_type=f32)                          # (2,256)
    scale = ss[0:1, :]
    shift = ss[1:2, :]

    # ---- layer 1 at the positions layer 2 consumes (lane-dense) ------------
    y1d = jnp.dot(p1d_ref[...], wbd_ref[...],
                  preferred_element_type=f32)                         # (B*32,256)
    a1 = y1d * scale + shift
    a1 = jnp.where(a1 >= 0, a1, slope * a1)

    # ---- layer 2: ONE (B*32,256) x (256,32) contraction ---------------------
    y2 = jnp.dot(a1, w2f_ref[...], preferred_element_type=f32)        # (B*32,32)

    # ---- BatchNorm-2 (padded rows masked out of the statistics) ------------
    r2 = jax.lax.broadcasted_iota(jnp.int32, (rows2, 1), 0)
    valid2 = (r2 & (P2B - 1)) < NVALID                                # 25 real / 32
    m2 = jnp.sum(jnp.where(valid2, y2, 0.0), axis=0,
                 keepdims=True) * (1.0 / n2)
    c2 = y2 - m2
    v2 = jnp.sum(jnp.where(valid2, c2 * c2, 0.0), axis=0,
                 keepdims=True) * (1.0 / n2)
    s2 = pk_ref[2:3, :] * jax.lax.rsqrt(v2 + eps)
    a2 = c2 * s2 + pk_ref[3:4, :]
    a2 = jnp.where(a2 >= 0, a2, slope * a2)                           # (B*32,32)

    # ---- layer 3 (1x1 output): VPU multiply + reduction, no MXU -------------
    # wm3 is pre-tiled over batch and zero on padded rows / the 5th row & col,
    # so pad garbage is weighted out.
    t = a2 * wm3_ref[...]                                             # (B*32,32)
    t3 = t.reshape(batch, P2B, 2 * HD)                                # view-safe
    y3 = jnp.sum(jnp.sum(t3, axis=2), axis=1, keepdims=True)          # (B,1)
    o_ref[...] = y3 + pk_ref[4:5, 0:1]                                # + conv3 bias


# ------------------------------- JAX wrappers --------------------------------
def _prep_patches(x):
    """Static-strided-slice im2col (no gathers).  Returns
    p1  (pad8(B*169), 16): layer-1 patches, rows (b, oh1, ow1), cols (kh, kw)
    p1d (B*32, 256)      : lane-dense layer-2 im2col, rows (b, pos) with
                           pos = oh2*5+ow2 padded 25->32, cols (tap, kh1, kw1)
    """
    B = x.shape[0]
    x2 = x[:, 0].astype(jnp.float32)                              # (B, 28, 28)

    taps = []
    for kh in range(K):
        for kw in range(K):
            taps.append(x2[:, kh:kh + S * HO1 - 1:S, kw:kw + S * HO1 - 1:S])
    p1 = jnp.stack(taps, axis=-1)                                 # (B, 13, 13, 16)
    n1 = B * HO1 * HO1
    p1_flat = jnp.pad(p1.reshape(n1, K1), ((0, (-n1) % 8), (0, 0)))

    blocks = []
    for kh in range(K):
        for kw in range(K):
            blk = p1[:, kh:kh + S * HO2 - 1:S, kw:kw + S * HO2 - 1:S, :]  # (B,5,5,16)
            blk = blk.reshape(B, NVALID, K1)
            blk = jnp.pad(blk, ((0, 0), (0, P2B - NVALID), (0, 0)))       # (B,32,16)
            blocks.append(blk)
    p1d = jnp.stack(blocks, axis=2).reshape(B * P2B, KD)          # (B*32, 256)
    return p1_flat, p1d


def prepare_params(params, batch):
    """One-time weight packing (hoisted out of the per-forward hot path)."""
    (w1, _b1, g1, be1), (w2, _b2, g2, be2), (w3, b3, _, _) = params
    f32 = jnp.float32
    # conv biases before BatchNorm are no-ops (cancelled by mean subtraction).
    w1m = w1.reshape(HD, K1).T.astype(f32)                        # [(kh,kw), c]
    wbd = jnp.kron(jnp.eye(NPOS, dtype=f32), w1m)                 # (256, 256)
    w2f = jnp.transpose(w2, (2, 3, 1, 0)).reshape(KD, 2 * HD).astype(f32)
    tmat = jnp.tile(jnp.eye(HD, dtype=f32), (1, NPOS))            # (16, 256)
    wm3 = jnp.zeros((HO2, HO2, 2 * HD), f32)
    wm3 = wm3.at[:K, :K, :].set(jnp.transpose(w3[0], (1, 2, 0)))
    wm3 = jnp.pad(wm3.reshape(NVALID, 2 * HD), ((0, P2B - NVALID), (0, 0)))
    wm3t = jnp.tile(wm3, (batch, 1))                              # (B*32, 32)
    pk = jnp.zeros((5, 2 * HD), f32)
    pk = pk.at[0, :HD].set(g1).at[1, :HD].set(be1)
    pk = pk.at[2, :].set(g2).at[3, :].set(be2)
    pk = pk.at[4, 0].set(b3[0])
    return (w1m, wbd, w2f, tmat, wm3t, pk)


@jax.jit
def discriminator_forward(x, prepped):
    assert x.shape[1:] == (1, H_IN, H_IN), x.shape
    w1m, wbd, w2f, tmat, wm3t, pk = prepped
    B = x.shape[0]
    assert wm3t.shape[0] == B * P2B, "prepared params were packed for another batch"
    p1, p1d = _prep_patches(x)

    rows2 = B * P2B
    flops = 2 * (p1.shape[0] * K1 * HD        # BN-1 stats matmul
                 + 2 * HD * KD                # affine tiling matmul
                 + rows2 * KD * KD            # block-diagonal layer-1 matmul
                 + rows2 * KD * 2 * HD)       # layer-2 matmul
    flops += 8 * rows2 * KD + 12 * rows2 * 2 * HD   # VPU elementwise / reduces
    bytes_accessed = 4 * (p1.size + p1d.size + w1m.size + wbd.size + w2f.size
                          + tmat.size + wm3t.size + pk.size + B)

    return pl.pallas_call(
        _fused_disc_kernel,
        out_shape=jax.ShapeDtypeStruct((B, 1), jnp.float32),
        in_specs=[pl.BlockSpec(memory_space=pltpu.MemorySpace.VMEM)] * 8,
        out_specs=pl.BlockSpec(memory_space=pltpu.MemorySpace.VMEM),
        cost_estimate=pl.CostEstimate(flops=flops, transcendentals=3 * HD,
                                      bytes_accessed=bytes_accessed),
    )(p1, p1d, w1m, wbd, w2f, tmat, wm3t, pk)


# ------------------------------ test harness --------------------------------
def init_params(key):
    """Synthetic parameters with the PyTorch shapes (OIHW weights)."""
    shapes = [(HD, 1, K, K), (2 * HD, HD, K, K), (1, 2 * HD, K, K)]
    params = []
    for i, shp in enumerate(shapes):
        kw, kb, kg, kbe = jax.random.split(jax.random.fold_in(key, i), 4)
        w = jax.random.normal(kw, shp, jnp.float32) * 0.05
        b = jax.random.uniform(kb, (shp[0],), jnp.float32, -0.05, 0.05)
        gamma = 1.0 + 0.1 * jax.random.normal(kg, (shp[0],), jnp.float32)
        beta = 0.05 * jax.random.normal(kbe, (shp[0],), jnp.float32)
        params.append((w, b, gamma, beta))
    return params


def reference_forward(x, params):
    """Pure-JAX reference mirroring the PyTorch module exactly."""
    def conv(x, w, b):
        y = jax.lax.conv_general_dilated(
            x, w, window_strides=(S, S), padding="VALID",
            dimension_numbers=("NCHW", "OIHW", "NCHW"))
        return y + b[None, :, None, None]

    def bn_lrelu(y, g, be):
        mean = jnp.mean(y, axis=(0, 2, 3), keepdims=True)
        var = jnp.mean((y - mean) ** 2, axis=(0, 2, 3), keepdims=True)
        yn = (y - mean) / jnp.sqrt(var + 1e-5)
        yn = yn * g[None, :, None, None] + be[None, :, None, None]
        return jnp.where(yn >= 0, yn, 0.2 * yn)

    (w1, b1, g1, be1), (w2, b2, g2, be2), (w3, b3, _, _) = params
    x = bn_lrelu(conv(x, w1, b1), g1, be1)
    x = bn_lrelu(conv(x, w2, b2), g2, be2)
    x = conv(x, w3, b3)
    return x.reshape(x.shape[0], -1)


if __name__ == "__main__":
    key = jax.random.PRNGKey(0)
    kx, kp = jax.random.split(key)
    # MNIST-like input, NCHW: batch=2, 1 channel, 28x28 -> output (2, 1)
    x = jax.random.normal(kx, (2, 1, H_IN, H_IN), jnp.float32)
    params = init_params(kp)

    prepped = prepare_params(params, batch=x.shape[0])   # one-time, off hot path
    out = jax.block_until_ready(discriminator_forward(x, prepped))
    ref = jax.block_until_ready(reference_forward(x, params))

    assert out.shape == (2, 1), out.shape
    assert jnp.allclose(out, ref, atol=1e-4, rtol=1e-4), (out, ref)
    print("KERNEL_OK")
</pallas_src>

<mosaic_0001>
module attributes {stable_mosaic.version = 11 : i64} {
  func.func @_fused_disc_kernel(%arg0: memref<344x16xf32, #tpu.memory_space<vmem>>, %arg1: memref<64x256xf32, #tpu.memory_space<vmem>>, %arg2: memref<16x16xf32, #tpu.memory_space<vmem>>, %arg3: memref<256x256xf32, #tpu.memory_space<vmem>>, %arg4: memref<256x32xf32, #tpu.memory_space<vmem>>, %arg5: memref<16x256xf32, #tpu.memory_space<vmem>>, %arg6: memref<64x32xf32, #tpu.memory_space<vmem>>, %arg7: memref<5x32xf32, #tpu.memory_space<vmem>>, %arg8: memref<2x1xf32, #tpu.memory_space<vmem>>) attributes {dimension_semantics = [], scalar_prefetch = 0 : i64, scratch_operands = 0 : i64, tpu.core_type = #tpu.core_type<tc>} {
    %c0 = arith.constant 0 : index
    %c0_0 = arith.constant 0 : index
    %0 = vector.load %arg0[%c0, %c0_0] : memref<344x16xf32, #tpu.memory_space<vmem>>, vector<344x16xf32>
    %c0_1 = arith.constant 0 : index
    %c0_2 = arith.constant 0 : index
    %1 = vector.load %arg2[%c0_1, %c0_2] : memref<16x16xf32, #tpu.memory_space<vmem>>, vector<16x16xf32>
    %cst = arith.constant dense<0.000000e+00> : vector<344x16xf32>
    %2 = tpu.matmul %0, %1, %cst {dimension_numbers = #tpu.dot_dimension_numbers<[1], [0], [0], [1], [0, 0, 1, 1], [], []>} : vector<344x16xf32>, vector<16x16xf32>, vector<344x16xf32> -> vector<344x16xf32>
    %3 = tpu.iota {dimensions = array<i32: 0>} : vector<344x1xi32>
    %c338_i32 = arith.constant 338 : i32
    %4 = vector.broadcast %c338_i32 : i32 to vector<344x1xi32>
    %5 = arith.cmpi slt, %3, %4 : vector<344x1xi32>
    %cst_3 = arith.constant dense<0.000000e+00> : vector<16xf32>
    %6 = vector.multi_reduction <add>, %2, %cst_3 [0] : vector<344x16xf32> to vector<16xf32>
    %7 = vector.shape_cast %6 : vector<16xf32> to vector<1x16xf32>
    %cst_4 = arith.constant 2.958580e-03 : f32
    %8 = vector.broadcast %cst_4 : f32 to vector<1x16xf32>
    %9 = arith.mulf %7, %8 : vector<1x16xf32>
    %10 = vector.broadcast %9 : vector<1x16xf32> to vector<344x16xf32>
    %11 = arith.subf %2, %10 : vector<344x16xf32>
    %12 = arith.mulf %11, %11 : vector<344x16xf32>
    %cst_5 = arith.constant 0.000000e+00 : f32
    %13 = vector.shape_cast %5 : vector<344x1xi1> to vector<344x1xi1>
    %14 = vector.broadcast %13 : vector<344x1xi1> to vector<344x16xi1>
    %15 = vector.broadcast %cst_5 : f32 to vector<344x16xf32>
    %16 = arith.select %14, %12, %15 : vector<344x16xi1>, vector<344x16xf32>
    %cst_6 = arith.constant dense<0.000000e+00> : vector<16xf32>
    %17 = vector.multi_reduction <add>, %16, %cst_6 [0] : vector<344x16xf32> to vector<16xf32>
    %18 = vector.shape_cast %17 : vector<16xf32> to vector<1x16xf32>
    %cst_7 = arith.constant 2.958580e-03 : f32
    %19 = vector.broadcast %cst_7 : f32 to vector<1x16xf32>
    %20 = arith.mulf %18, %19 : vector<1x16xf32>
    %c0_8 = arith.constant 0 : index
    %c0_9 = arith.constant 0 : index
    %21 = vector.load %arg7[%c0_8, %c0_9] : memref<5x32xf32, #tpu.memory_space<vmem>>, vector<1x16xf32>
    %cst_10 = arith.constant 9.99999974E-6 : f32
    %22 = vector.broadcast %cst_10 : f32 to vector<1x16xf32>
    %23 = arith.addf %20, %22 : vector<1x16xf32>
    %24 = math.rsqrt %23 : vector<1x16xf32>
    %25 = arith.mulf %21, %24 : vector<1x16xf32>
    %c1 = arith.constant 1 : index
    %c0_11 = arith.constant 0 : index
    %26 = vector.load %arg7[%c1, %c0_11] : memref<5x32xf32, #tpu.memory_space<vmem>>, vector<1x16xf32>
    %27 = arith.mulf %9, %25 : vector<1x16xf32>
    %28 = arith.subf %26, %27 : vector<1x16xf32>
    %29 = tpu.concatenate %25, %28 in 0 : vector<1x16xf32>, vector<1x16xf32> -> vector<2x16xf32>
    %c0_12 = arith.constant 0 : index
    %c0_13 = arith.constant 0 : index
    %30 = vector.load %arg5[%c0_12, %c0_13] : memref<16x256xf32, #tpu.memory_space<vmem>>, vector<16x256xf32>
    %cst_14 = arith.constant dense<0.000000e+00> : vector<2x256xf32>
    %31 = tpu.matmul %29, %30, %cst_14 {dimension_numbers = #tpu.dot_dimension_numbers<[1], [0], [0], [1], [0, 0, 1, 1], [], []>} : vector<2x16xf32>, vector<16x256xf32>, vector<2x256xf32> -> vector<2x256xf32>
    %32 = vector.extract_strided_slice %31 {offsets = [0, 0], sizes = [1, 256], strides = [1, 1]} : vector<2x256xf32> to vector<1x256xf32>
    %33 = vector.extract_strided_slice %31 {offsets = [1, 0], sizes = [1, 256], strides = [1, 1]} : vector<2x256xf32> to vector<1x256xf32>
    %c0_15 = arith.constant 0 : index
    %c0_16 = arith.constant 0 : index
    %34 = vector.load %arg1[%c0_15, %c0_16] : memref<64x256xf32, #tpu.memory_space<vmem>>, vector<64x256xf32>
    %c0_17 = arith.constant 0 : index
    %c0_18 = arith.constant 0 : index
    %35 = vector.load %arg3[%c0_17, %c0_18] : memref<256x256xf32, #tpu.memory_space<vmem>>, vector<256x256xf32>
    %cst_19 = arith.constant dense<0.000000e+00> : vector<64x256xf32>
    %36 = tpu.matmul %34, %35, %cst_19 {dimension_numbers = #tpu.dot_dimension_numbers<[1], [0], [0], [1], [0, 0, 1, 1], [], []>} : vector<64x256xf32>, vector<256x256xf32>, vector<64x256xf32> -> vector<64x256xf32>
    %37 = vector.broadcast %32 : vector<1x256xf32> to vector<64x256xf32>
    %38 = arith.mulf %36, %37 : vector<64x256xf32>
    %39 = vector.broadcast %33 : vector<1x256xf32> to vector<64x256xf32>
    %40 = arith.addf %38, %39 : vector<64x256xf32>
    %cst_20 = arith.constant 0.000000e+00 : f32
    %41 = vector.broadcast %cst_20 : f32 to vector<64x256xf32>
    %42 = arith.cmpf oge, %40, %41 : vector<64x256xf32>
    %cst_21 = arith.constant 2.000000e-01 : f32
    %43 = vector.broadcast %cst_21 : f32 to vector<64x256xf32>
    %44 = arith.mulf %43, %40 : vector<64x256xf32>
    %45 = arith.select %42, %40, %44 : vector<64x256xi1>, vector<64x256xf32>
    %c0_22 = arith.constant 0 : index
    %c0_23 = arith.constant 0 : index
    %46 = vector.load %arg4[%c0_22, %c0_23] : memref<256x32xf32, #tpu.memory_space<vmem>>, vector<256x32xf32>
    %cst_24 = arith.constant dense<0.000000e+00> : vector<64x32xf32>
    %47 = tpu.matmul %45, %46, %cst_24 {dimension_numbers = #tpu.dot_dimension_numbers<[1], [0], [0], [1], [0, 0, 1, 1], [], []>} : vector<64x256xf32>, vector<256x32xf32>, vector<64x32xf32> -> vector<64x32xf32>
    %48 = tpu.iota {dimensions = array<i32: 0>} : vector<64x1xi32>
    %c31_i32 = arith.constant 31 : i32
    %49 = vector.broadcast %c31_i32 : i32 to vector<64x1xi32>
    %50 = arith.andi %48, %49 : vector<64x1xi32>
    %c25_i32 = arith.constant 25 : i32
    %51 = vector.broadcast %c25_i32 : i32 to vector<64x1xi32>
    %52 = arith.cmpi slt, %50, %51 : vector<64x1xi32>
    %cst_25 = arith.constant 0.000000e+00 : f32
    %53 = vector.shape_cast %52 : vector<64x1xi1> to vector<64x1xi1>
    %54 = vector.broadcast %53 : vector<64x1xi1> to vector<64x32xi1>
    %55 = vector.broadcast %cst_25 : f32 to vector<64x32xf32>
    %56 = arith.select %54, %47, %55 : vector<64x32xi1>, vector<64x32xf32>
    %cst_26 = arith.constant dense<0.000000e+00> : vector<32xf32>
    %57 = vector.multi_reduction <add>, %56, %cst_26 [0] : vector<64x32xf32> to vector<32xf32>
    %58 = vector.shape_cast %57 : vector<32xf32> to vector<1x32xf32>
    %cst_27 = arith.constant 2.000000e-02 : f32
    %59 = vector.broadcast %cst_27 : f32 to vector<1x32xf32>
    %60 = arith.mulf %58, %59 : vector<1x32xf32>
    %61 = vector.broadcast %60 : vector<1x32xf32> to vector<64x32xf32>
    %62 = arith.subf %47, %61 : vector<64x32xf32>
    %63 = arith.mulf %62, %62 : vector<64x32xf32>
    %cst_28 = arith.constant 0.000000e+00 : f32
    %64 = vector.shape_cast %52 : vector<64x1xi1> to vector<64x1xi1>
    %65 = vector.broadcast %64 : vector<64x1xi1> to vector<64x32xi1>
    %66 = vector.broadcast %cst_28 : f32 to vector<64x32xf32>
    %67 = arith.select %65, %63, %66 : vector<64x32xi1>, vector<64x32xf32>
    %cst_29 = arith.constant dense<0.000000e+00> : vector<32xf32>
    %68 = vector.multi_reduction <add>, %67, %cst_29 [0] : vector<64x32xf32> to vector<32xf32>
    %69 = vector.shape_cast %68 : vector<32xf32> to vector<1x32xf32>
    %cst_30 = arith.constant 2.000000e-02 : f32
    %70 = vector.broadcast %cst_30 : f32 to vector<1x32xf32>
    %71 = arith.mulf %69, %70 : vector<1x32xf32>
    %c2 = arith.constant 2 : index
    %c0_31 = arith.constant 0 : index
    %72 = vector.load %arg7[%c2, %c0_31] : memref<5x32xf32, #tpu.memory_space<vmem>>, vector<1x32xf32>
    %cst_32 = arith.constant 9.99999974E-6 : f32
    %73 = vector.broadcast %cst_32 : f32 to vector<1x32xf32>
    %74 = arith.addf %71, %73 : vector<1x32xf32>
    %75 = math.rsqrt %74 : vector<1x32xf32>
    %76 = arith.mulf %72, %75 : vector<1x32xf32>
    %77 = vector.broadcast %76 : vector<1x32xf32> to vector<64x32xf32>
    %78 = arith.mulf %62, %77 : vector<64x32xf32>
    %c3 = arith.constant 3 : index
    %c0_33 = arith.constant 0 : index
    %79 = vector.load %arg7[%c3, %c0_33] : memref<5x32xf32, #tpu.memory_space<vmem>>, vector<1x32xf32>
    %80 = vector.broadcast %79 : vector<1x32xf32> to vector<64x32xf32>
    %81 = arith.addf %78, %80 : vector<64x32xf32>
    %cst_34 = arith.constant 0.000000e+00 : f32
    %82 = vector.broadcast %cst_34 : f32 to vector<64x32xf32>
    %83 = arith.cmpf oge, %81, %82 : vector<64x32xf32>
    %cst_35 = arith.constant 2.000000e-01 : f32
    %84 = vector.broadcast %cst_35 : f32 to vector<64x32xf32>
    %85 = arith.mulf %84, %81 : vector<64x32xf32>
    %86 = arith.select %83, %81, %85 : vector<64x32xi1>, vector<64x32xf32>
    %c0_36 = arith.constant 0 : index
    %c0_37 = arith.constant 0 : index
    %87 = vector.load %arg6[%c0_36, %c0_37] : memref<64x32xf32, #tpu.memory_space<vmem>>, vector<64x32xf32>
    %88 = arith.mulf %86, %87 : vector<64x32xf32>
    %89 = vector.shape_cast %88 : vector<64x32xf32> to vector<2x32x32xf32>
    %cst_38 = arith.constant dense<0.000000e+00> : vector<2x32xf32>
    %90 = vector.multi_reduction <add>, %89, %cst_38 [2] : vector<2x32x32xf32> to vector<2x32xf32>
    %cst_39 = arith.constant dense<0.000000e+00> : vector<2xf32>
    %91 = vector.multi_reduction <add>, %90, %cst_39 [1] : vector<2x32xf32> to vector<2xf32>
    %92 = vector.shape_cast %91 : vector<2xf32> to vector<2x1xf32>
    %c4 = arith.constant 4 : index
    %c0_40 = arith.constant 0 : index
    %93 = vector.load %arg7[%c4, %c0_40] : memref<5x32xf32, #tpu.memory_space<vmem>>, vector<1x1xf32>
    %94 = vector.broadcast %93 : vector<1x1xf32> to vector<2x1xf32>
    %95 = arith.addf %92, %94 : vector<2x1xf32>
    %c0_41 = arith.constant 0 : index
    %c0_42 = arith.constant 0 : index
    %96 = vector.load %arg8[%c0_41, %c0_42] : memref<2x1xf32, #tpu.memory_space<vmem>>, vector<2x1xf32>
    tpu.vector_store %arg8[%c0_41, %c0_42], %95 {strides = array<i32>} : memref<2x1xf32, #tpu.memory_space<vmem>>, vector<2x1xf32>,
    return
  }
}

</mosaic_0001>

<llo_original>
// kernel: discriminator_forward.1
$region0: #{discriminator_forward.1}
  #allocation0 [shape = 'u32[]', space=smem, size = 0x4, offset = 0x4, fixed_abs, tag = 'smem constant byte address 0x4 - core index']
  #allocation1 [shape = 'u32[144,128]{1,0:T(1,128)}', space=vmem, size = 0x12000, scoped, tag = 'internal scratch']
  %s0 = inlined_call_operand.vmem [shape: f32[344,16], index: 0, kind: input, shape index: {}]
  %s1 = inlined_call_operand.vmem [shape: f32[64,256], index: 1, kind: input, shape index: {}]
  %s2 = inlined_call_operand.vmem [shape: f32[16,16], index: 2, kind: input, shape index: {}]
  %s3 = inlined_call_operand.vmem [shape: f32[256,256], index: 3, kind: input, shape index: {}]
  %s4 = inlined_call_operand.vmem [shape: f32[256,32], index: 4, kind: input, shape index: {}]
  %s5 = inlined_call_operand.vmem [shape: f32[16,256], index: 5, kind: input, shape index: {}]
  %s6 = inlined_call_operand.vmem [shape: f32[64,32], index: 6, kind: input, shape index: {}]
  %s7 = inlined_call_operand.vmem [shape: f32[5,32], index: 7, kind: input, shape index: {}]
  %s8 = inlined_call_operand.vmem [shape: f32[2,1], index: 8, kind: output, shape index: {}]
  %s9 = sld [smem:[#allocation0]]
  $region42: #{discriminator_forward.1} parent=0
    _
  %s11 = ssub.s32 1, %s9
  %s12 = scalar_select 0, %s11, %s9
  // Predicated region
  $region2: #{discriminator_forward.1} parent=0 // pred_check
    _
  $region3: #{discriminator_forward.1} parent=0 // pred_check_branch
    %14 = sbr.rel (0) target = $region5
  $region4: #{discriminator_forward.1} parent=0 // pred_region
    _
  $region5: #{discriminator_forward.1} parent=0 // pred_fallthru
    _
  // Predicated region
  $region6: #{discriminator_forward.1} parent=0 // pred_check
    _
  $region7: #{discriminator_forward.1} parent=0 // pred_check_branch
    %16 = sbr.rel (0) target = $region9
  $region8: #{discriminator_forward.1} parent=0 // pred_region
    _
  $region9: #{discriminator_forward.1} parent=0 // pred_fallthru
    _
  // Predicated region
  $region10: #{discriminator_forward.1} parent=0 // pred_check
    _
  $region11: #{discriminator_forward.1} parent=0 // pred_check_branch
    %18 = sbr.rel (0) target = $region13
  $region12: #{discriminator_forward.1} parent=0 // pred_region
    _
  $region13: #{discriminator_forward.1} parent=0 // pred_fallthru
    _
  // Predicated region
  $region14: #{discriminator_forward.1} parent=0 // pred_check
    _
  $region15: #{discriminator_forward.1} parent=0 // pred_check_branch
    %20 = sbr.rel (0) target = $region17
  $region16: #{discriminator_forward.1} parent=0 // pred_region
    _
  $region17: #{discriminator_forward.1} parent=0 // pred_fallthru
    _
  // Predicated region
  $region18: #{discriminator_forward.1} parent=0 // pred_check
    _
  $region19: #{discriminator_forward.1} parent=0 // pred_check_branch
    %22 = sbr.rel (0) target = $region21
  $region20: #{discriminator_forward.1} parent=0 // pred_region
    _
  $region21: #{discriminator_forward.1} parent=0 // pred_fallthru
    _
  // Predicated region
  $region22: #{discriminator_forward.1} parent=0 // pred_check
    _
  $region23: #{discriminator_forward.1} parent=0 // pred_check_branch
    %24 = sbr.rel (0) target = $region25
  $region24: #{discriminator_forward.1} parent=0 // pred_region
    _
  $region25: #{discriminator_forward.1} parent=0 // pred_fallthru
    _
  // Predicated region
  $region26: #{discriminator_forward.1} parent=0 // pred_check
    _
  $region27: #{discriminator_forward.1} parent=0 // pred_check_branch
    %26 = sbr.rel (0) target = $region29
  $region28: #{discriminator_forward.1} parent=0 // pred_region
    _
  $region29: #{discriminator_forward.1} parent=0 // pred_fallthru
    _
  // Predicated region
  $region30: #{discriminator_forward.1} parent=0 // pred_check
    _
  $region31: #{discriminator_forward.1} parent=0 // pred_check_branch
    %28 = sbr.rel (0) target = $region33
  $region32: #{discriminator_forward.1} parent=0 // pred_region
    _
  $region33: #{discriminator_forward.1} parent=0 // pred_fallthru
    _
  %v29 = vld [vmem:[%s0] sm:$0xff]
  %v30 = vld [vmem:[%s0 + $0x8] sm:$0xff]
  %v31 = vld [vmem:[%s0 + $0x10] sm:$0xff]
  %v32 = vld [vmem:[%s0 + $0x18] sm:$0xff]
  %v33 = vld [vmem:[%s0 + $0x20] sm:$0xff]
  %v34 = vld [vmem:[%s0 + $0x28] sm:$0xff]
  %v35 = vld [vmem:[%s0 + $0x30] sm:$0xff]
  %v36 = vld [vmem:[%s0 + $0x38] sm:$0xff]
  %v37 = vld [vmem:[%s0 + $0x40] sm:$0xff]
  %v38 = vld [vmem:[%s0 + $0x48] sm:$0xff]
  %v39 = vld [vmem:[%s0 + $0x50] sm:$0xff]
  %v40 = vld [vmem:[%s0 + $0x58] sm:$0xff]
  %v41 = vld [vmem:[%s0 + $0x60] sm:$0xff]
  %v42 = vld [vmem:[%s0 + $0x68] sm:$0xff]
  %v43 = vld [vmem:[%s0 + $0x70] sm:$0xff]
  %v44 = vld [vmem:[%s0 + $0x78] sm:$0xff]
  %v45 = vld [vmem:[%s0 + $0x80] sm:$0xff]
  %v46 = vld [vmem:[%s0 + $0x88] sm:$0xff]
  %v47 = vld [vmem:[%s0 + $0x90] sm:$0xff]
  %v48 = vld [vmem:[%s0 + $0x98] sm:$0xff]
  %v49 = vld [vmem:[%s0 + $0xa0] sm:$0xff]
  %v50 = vld [vmem:[%s0 + $0xa8] sm:$0xff]
  %v51 = vld [vmem:[%s0 + $0xb0] sm:$0xff]
  %v52 = vld [vmem:[%s0 + $0xb8] sm:$0xff]
  %v53 = vld [vmem:[%s0 + $0xc0] sm:$0xff]
  %v54 = vld [vmem:[%s0 + $0xc8] sm:$0xff]
  %v55 = vld [vmem:[%s0 + $0xd0] sm:$0xff]
  %v56 = vld [vmem:[%s0 + $0xd8] sm:$0xff]
  %v57 = vld [vmem:[%s0 + $0xe0] sm:$0xff]
  %v58 = vld [vmem:[%s0 + $0xe8] sm:$0xff]
  %v59 = vld [vmem:[%s0 + $0xf0] sm:$0xff]
  %v60 = vld [vmem:[%s0 + $0xf8] sm:$0xff]
  %v61 = vld [vmem:[%s0 + $0x100] sm:$0xff]
  %v62 = vld [vmem:[%s0 + $0x108] sm:$0xff]
  %v63 = vld [vmem:[%s0 + $0x110] sm:$0xff]
  %v64 = vld [vmem:[%s0 + $0x118] sm:$0xff]
  %v65 = vld [vmem:[%s0 + $0x120] sm:$0xff]
  %v66 = vld [vmem:[%s0 + $0x128] sm:$0xff]
  %v67 = vld [vmem:[%s0 + $0x130] sm:$0xff]
  %v68 = vld [vmem:[%s0 + $0x138] sm:$0xff]
  %v69 = vld [vmem:[%s0 + $0x140] sm:$0xff]
  %v70 = vld [vmem:[%s0 + $0x148] sm:$0xff]
  %v71 = vld [vmem:[%s0 + $0x150] sm:$0xff]
  %v72 = vld [vmem:[%s2] sm:$0xff]
  %v73 = vld [vmem:[%s2 + $0x8] sm:$0xff]
  %vm74 = vcmask 130048
  %v76 = vsel %vm74, %v29, 0
  %v79 = vsel %vm74, %v30, 0
  %v82 = vsel %vm74, %v31, 0
  %v85 = vsel %vm74, %v32, 0
  %v88 = vsel %vm74, %v33, 0
  %v91 = vsel %vm74, %v34, 0
  %v94 = vsel %vm74, %v35, 0
  %v97 = vsel %vm74, %v36, 0
  %v100 = vsel %vm74, %v37, 0
  %v103 = vsel %vm74, %v38, 0
  %v106 = vsel %vm74, %v39, 0
  %v109 = vsel %vm74, %v40, 0
  %v112 = vsel %vm74, %v41, 0
  %v115 = vsel %vm74, %v42, 0
  %v118 = vsel %vm74, %v43, 0
  %v121 = vsel %vm74, %v44, 0
  %v124 = vsel %vm74, %v45, 0
  %v127 = vsel %vm74, %v46, 0
  %v130 = vsel %vm74, %v47, 0
  %v133 = vsel %vm74, %v48, 0
  %v136 = vsel %vm74, %v49, 0
  %v139 = vsel %vm74, %v50, 0
  %v142 = vsel %vm74, %v51, 0
  %v145 = vsel %vm74, %v52, 0
  %v148 = vsel %vm74, %v53, 0
  %v151 = vsel %vm74, %v54, 0
  %v154 = vsel %vm74, %v55, 0
  %v157 = vsel %vm74, %v56, 0
  %v160 = vsel %vm74, %v57, 0
  %v163 = vsel %vm74, %v58, 0
  %v166 = vsel %vm74, %v59, 0
  %v169 = vsel %vm74, %v60, 0
  %v172 = vsel %vm74, %v61, 0
  %v175 = vsel %vm74, %v62, 0
  %v178 = vsel %vm74, %v63, 0
  %v181 = vsel %vm74, %v64, 0
  %v184 = vsel %vm74, %v65, 0
  %v187 = vsel %vm74, %v66, 0
  %v190 = vsel %vm74, %v67, 0
  %v193 = vsel %vm74, %v68, 0
  %v196 = vsel %vm74, %v69, 0
  %v199 = vsel %vm74, %v70, 0
  %v202 = vsel %vm74, %v71, 0
  %204 = vmatprep.subr.mxu0 0.0
  %205 = vmatpush1.msra.mxu0 0.0
  %206 = vmatprep.subr.mxu0 0.0
  %207 = vmatpush1.msra.mxu0 0.0
  %208 = vmatprep.subr.mxu0 0.0
  %209 = vmatpush1.msra.mxu0 0.0
  %210 = vmatprep.subr.mxu0 0.0
  %211 = vmatpush1.msra.mxu0 0.0
  %212 = vmatprep.subr.mxu0 0.0
  %213 = vmatpush1.msra.mxu0 0.0
  %214 = vmatprep.subr.mxu0 0.0
  %215 = vmatpush1.msra.mxu0 0.0
  %216 = vmatprep.subr.mxu0 0.0
  %217 = vmatpush1.msra.mxu0 0.0
  %218 = vmatprep.subr.mxu0 0.0
  %219 = vmatpush1.msra.mxu0 0.0
  %220 = vmatprep.subr.mxu0 0.0
  %221 = vmatpush1.msra.mxu0 0.0
  %222 = vmatprep.subr.mxu0 0.0
  %223 = vmatpush1.msra.mxu0 0.0
  %224 = vmatprep.subr.mxu0 0.0
  %225 = vmatpush1.msra.mxu0 0.0
  %226 = vmatprep.subr.mxu0 0.0
  %227 = vmatpush1.msra.mxu0 0.0
  %228 = vmatprep.subr.mxu0 0.0
  %229 = vmatpush1.msra.mxu0 0.0
  %230 = vmatprep.subr.mxu0 0.0
  %231 = vmatpush1.msra.mxu0 0.0
  %232 = vmatprep.subr.mxu0 0.0
  %233 = vmatpush1.msra.mxu0 %v73
  %234 = vmatprep.subr.mxu0 0.0
  %235 = vmatpush1.msra.mxu0 %v72
  %236 = vmatprep.subr.mxu0 0.0
  %237 = vmatpush2.msra.mxu0 0.0
  %238 = vmatprep.subr.mxu0 0.0
  %239 = vmatpush2.msra.mxu0 0.0
  %240 = vmatprep.subr.mxu0 0.0
  %241 = vmatpush2.msra.mxu0 0.0
  %242 = vmatprep.subr.mxu0 0.0
  %243 = vmatpush2.msra.mxu0 0.0
  %244 = vmatprep.subr.mxu0 0.0
  %245 = vmatpush2.msra.mxu0 0.0
  %246 = vmatprep.subr.mxu0 0.0
  %247 = vmatpush2.msra.mxu0 0.0
  %248 = vmatprep.subr.mxu0 0.0
  %249 = vmatpush2.msra.mxu0 0.0
  %250 = vmatprep.subr.mxu0 0.0
  %251 = vmatpush2.msra.mxu0 0.0
  %252 = vmatprep.subr.mxu0 0.0
  %253 = vmatpush2.msra.mxu0 0.0
  %254 = vmatprep.subr.mxu0 0.0
  %255 = vmatpush2.msra.mxu0 0.0
  %256 = vmatprep.subr.mxu0 0.0
  %257 = vmatpush2.msra.mxu0 0.0
  %258 = vmatprep.subr.mxu0 0.0
  %259 = vmatpush2.msra.mxu0 0.0
  %260 = vmatprep.subr.mxu0 0.0
  %261 = vmatpush2.msra.mxu0 0.0
  %262 = vmatprep.subr.mxu0 0.0
  %263 = vmatpush2.msra.mxu0 0.0
  %264 = vmatprep.subr.mxu0 0.0
  %265 = vmatpush2.msra.mxu0 0.0
  %266 = vmatprep.subr.mxu0 0.0
  %267 = vmatpush2.msra.mxu0 0.0
  %268 = vmatprep.mubr.f32.mxu0 0.0
  %269 = vmatmul.mubr.f32.gmra.mxu0 %v76
  %v270 = vpop.f32.mrf.mxu0
  %v271 = vadd.f32 0.0, %v270
  %v272 = vpop.f32.mrf.mxu0
  %273 = vmatprep.mubr.f32.mxu0 0.0
  %274 = vmatmul.mubr.f32.gmra.mxu0 %v79
  %v275 = vpop.f32.mrf.mxu0
  %v276 = vadd.f32 0.0, %v275
  %v277 = vpop.f32.mrf.mxu0
  %278 = vmatprep.mubr.f32.mxu0 0.0
  %279 = vmatmul.mubr.f32.gmra.mxu0 %v82
  %v280 = vpop.f32.mrf.mxu0
  %v281 = vadd.f32 0.0, %v280
  %v282 = vpop.f32.mrf.mxu0
  %283 = vmatprep.mubr.f32.mxu0 0.0
  %284 = vmatmul.mubr.f32.gmra.mxu0 %v85
  %v285 = vpop.f32.mrf.mxu0
  %v286 = vadd.f32 0.0, %v285
  %v287 = vpop.f32.mrf.mxu0
  %288 = vmatprep.mubr.f32.mxu0 0.0
  %289 = vmatmul.mubr.f32.gmra.mxu0 %v88
  %v290 = vpop.f32.mrf.mxu0
  %v291 = vadd.f32 0.0, %v290
  %v292 = vpop.f32.mrf.mxu0
  %293 = vmatprep.mubr.f32.mxu0 0.0
  %294 = vmatmul.mubr.f32.gmra.mxu0 %v91
  %v295 = vpop.f32.mrf.mxu0
  %v296 = vadd.f32 0.0, %v295
  %v297 = vpop.f32.mrf.mxu0
  %298 = vmatprep.mubr.f32.mxu0 0.0
  %299 = vmatmul.mubr.f32.gmra.mxu0 %v94
  %v300 = vpop.f32.mrf.mxu0
  %v301 = vadd.f32 0.0, %v300
  %v302 = vpop.f32.mrf.mxu0
  %303 = vmatprep.mubr.f32.mxu0 0.0
  %304 = vmatmul.mubr.f32.gmra.mxu0 %v97
  %v305 = vpop.f32.mrf.mxu0
  %v306 = vadd.f32 0.0, %v305
  %v307 = vpop.f32.mrf.mxu0
  %308 = vmatprep.mubr.f32.mxu0 0.0
  %309 = vmatmul.mubr.f32.gmra.mxu0 %v100
  %v310 = vpop.f32.mrf.mxu0
  %v311 = vadd.f32 0.0, %v310
  %v312 = vpop.f32.mrf.mxu0
  %313 = vmatprep.mubr.f32.mxu0 0.0
  %314 = vmatmul.mubr.f32.gmra.mxu0 %v103
  %v315 = vpop.f32.mrf.mxu0
  %v316 = vadd.f32 0.0, %v315
  %v317 = vpop.f32.mrf.mxu0
  %318 = vmatprep.mubr.f32.mxu0 0.0
  %319 = vmatmul.mubr.f32.gmra.mxu0 %v106
  %v320 = vpop.f32.mrf.mxu0
  %v321 = vadd.f32 0.0, %v320
  %v322 = vpop.f32.mrf.mxu0
  %323 = vmatprep.mubr.f32.mxu0 0.0
  %324 = vmatmul.mubr.f32.gmra.mxu0 %v109
  %v325 = vpop.f32.mrf.mxu0
  %v326 = vadd.f32 0.0, %v325
  %v327 = vpop.f32.mrf.mxu0
  %328 = vmatprep.mubr.f32.mxu0 0.0
  %329 = vmatmul.mubr.f32.gmra.mxu0 %v112
  %v330 = vpop.f32.mrf.mxu0
  %v331 = vadd.f32 0.0, %v330
  %v332 = vpop.f32.mrf.mxu0
  %333 = vmatprep.mubr.f32.mxu0 0.0
  %334 = vmatmul.mubr.f32.gmra.mxu0 %v115
  %v335 = vpop.f32.mrf.mxu0
  %v336 = vadd.f32 0.0, %v335
  %v337 = vpop.f32.mrf.mxu0
  %338 = vmatprep.mubr.f32.mxu0 0.0
  %339 = vmatmul.mubr.f32.gmra.mxu0 %v118
  %v340 = vpop.f32.mrf.mxu0
  %v341 = vadd.f32 0.0, %v340
  %v342 = vpop.f32.mrf.mxu0
  %343 = vmatprep.mubr.f32.mxu0 0.0
  %344 = vmatmul.mubr.f32.gmra.mxu0 %v121
  %v345 = vpop.f32.mrf.mxu0
  %v346 = vadd.f32 0.0, %v345
  %v347 = vpop.f32.mrf.mxu0
  %348 = vmatprep.mubr.f32.mxu0 0.0
  %349 = vmatmul.mubr.f32.gmra.mxu0 %v124
  %v350 = vpop.f32.mrf.mxu0
  %v351 = vadd.f32 0.0, %v350
  %v352 = vpop.f32.mrf.mxu0
  %353 = vmatprep.mubr.f32.mxu0 0.0
  %354 = vmatmul.mubr.f32.gmra.mxu0 %v127
  %v355 = vpop.f32.mrf.mxu0
  %v356 = vadd.f32 0.0, %v355
  %v357 = vpop.f32.mrf.mxu0
  %358 = vmatprep.mubr.f32.mxu0 0.0
  %359 = vmatmul.mubr.f32.gmra.mxu0 %v130
  %v360 = vpop.f32.mrf.mxu0
  %v361 = vadd.f32 0.0, %v360
  %v362 = vpop.f32.mrf.mxu0
  %363 = vmatprep.mubr.f32.mxu0 0.0
  %364 = vmatmul.mubr.f32.gmra.mxu0 %v133
  %v365 = vpop.f32.mrf.mxu0
  %v366 = vadd.f32 0.0, %v365
  %v367 = vpop.f32.mrf.mxu0
  %368 = vmatprep.mubr.f32.mxu0 0.0
  %369 = vmatmul.mubr.f32.gmra.mxu0 %v136
  %v370 = vpop.f32.mrf.mxu0
  %v371 = vadd.f32 0.0, %v370
  %v372 = vpop.f32.mrf.mxu0
  %373 = vmatprep.mubr.f32.mxu0 0.0
  %374 = vmatmul.mubr.f32.gmra.mxu0 %v139
  %v375 = vpop.f32.mrf.mxu0
  %v376 = vadd.f32 0.0, %v375
  %v377 = vpop.f32.mrf.mxu0
  %378 = vmatprep.mubr.f32.mxu0 0.0
  %379 = vmatmul.mubr.f32.gmra.mxu0 %v142
  %v380 = vpop.f32.mrf.mxu0
  %v381 = vadd.f32 0.0, %v380
  %v382 = vpop.f32.mrf.mxu0
  %383 = vmatprep.mubr.f32.mxu0 0.0
  %384 = vmatmul.mubr.f32.gmra.mxu0 %v145
  %v385 = vpop.f32.mrf.mxu0
  %v386 = vadd.f32 0.0, %v385
  %v387 = vpop.f32.mrf.mxu0
  %388 = vmatprep.mubr.f32.mxu0 0.0
  %389 = vmatmul.mubr.f32.gmra.mxu0 %v148
  %v390 = vpop.f32.mrf.mxu0
  %v391 = vadd.f32 0.0, %v390
  %v392 = vpop.f32.mrf.mxu0
  %393 = vmatprep.mubr.f32.mxu0 0.0
  %394 = vmatmul.mubr.f32.gmra.mxu0 %v151
  %v395 = vpop.f32.mrf.mxu0
  %v396 = vadd.f32 0.0, %v395
  %v397 = vpop.f32.mrf.mxu0
  %398 = vmatprep.mubr.f32.mxu0 0.0
  %399 = vmatmul.mubr.f32.gmra.mxu0 %v154
  %v400 = vpop.f32.mrf.mxu0
  %v401 = vadd.f32 0.0, %v400
  %v402 = vpop.f32.mrf.mxu0
  %403 = vmatprep.mubr.f32.mxu0 0.0
  %404 = vmatmul.mubr.f32.gmra.mxu0 %v157
  %v405 = vpop.f32.mrf.mxu0
  %v406 = vadd.f32 0.0, %v405
  %v407 = vpop.f32.mrf.mxu0
  %408 = vmatprep.mubr.f32.mxu0 0.0
  %409 = vmatmul.mubr.f32.gmra.mxu0 %v160
  %v410 = vpop.f32.mrf.mxu0
  %v411 = vadd.f32 0.0, %v410
  %v412 = vpop.f32.mrf.mxu0
  %413 = vmatprep.mubr.f32.mxu0 0.0
  %414 = vmatmul.mubr.f32.gmra.mxu0 %v163
  %v415 = vpop.f32.mrf.mxu0
  %v416 = vadd.f32 0.0, %v415
  %v417 = vpop.f32.mrf.mxu0
  %418 = vmatprep.mubr.f32.mxu0 0.0
  %419 = vmatmul.mubr.f32.gmra.mxu0 %v166
  %v420 = vpop.f32.mrf.mxu0
  %v421 = vadd.f32 0.0, %v420
  %v422 = vpop.f32.mrf.mxu0
  %423 = vmatprep.mubr.f32.mxu0 0.0
  %424 = vmatmul.mubr.f32.gmra.mxu0 %v169
  %v425 = vpop.f32.mrf.mxu0
  %v426 = vadd.f32 0.0, %v425
  %v427 = vpop.f32.mrf.mxu0
  %428 = vmatprep.mubr.f32.mxu0 0.0
  %429 = vmatmul.mubr.f32.gmra.mxu0 %v172
  %v430 = vpop.f32.mrf.mxu0
  %v431 = vadd.f32 0.0, %v430
  %v432 = vpop.f32.mrf.mxu0
  %433 = vmatprep.mubr.f32.mxu0 0.0
  %434 = vmatmul.mubr.f32.gmra.mxu0 %v175
  %v435 = vpop.f32.mrf.mxu0
  %v436 = vadd.f32 0.0, %v435
  %v437 = vpop.f32.mrf.mxu0
  %438 = vmatprep.mubr.f32.mxu0 0.0
  %439 = vmatmul.mubr.f32.gmra.mxu0 %v178
  %v440 = vpop.f32.mrf.mxu0
  %v441 = vadd.f32 0.0, %v440
  %v442 = vpop.f32.mrf.mxu0
  %443 = vmatprep.mubr.f32.mxu0 0.0
  %444 = vmatmul.mubr.f32.gmra.mxu0 %v181
  %v445 = vpop.f32.mrf.mxu0
  %v446 = vadd.f32 0.0, %v445
  %v447 = vpop.f32.mrf.mxu0
  %448 = vmatprep.mubr.f32.mxu0 0.0
  %449 = vmatmul.mubr.f32.gmra.mxu0 %v184
  %v450 = vpop.f32.mrf.mxu0
  %v451 = vadd.f32 0.0, %v450
  %v452 = vpop.f32.mrf.mxu0
  %453 = vmatprep.mubr.f32.mxu0 0.0
  %454 = vmatmul.mubr.f32.gmra.mxu0 %v187
  %v455 = vpop.f32.mrf.mxu0
  %v456 = vadd.f32 0.0, %v455
  %v457 = vpop.f32.mrf.mxu0
  %458 = vmatprep.mubr.f32.mxu0 0.0
  %459 = vmatmul.mubr.f32.gmra.mxu0 %v190
  %v460 = vpop.f32.mrf.mxu0
  %v461 = vadd.f32 0.0, %v460
  %v462 = vpop.f32.mrf.mxu0
  %463 = vmatprep.mubr.f32.mxu0 0.0
  %464 = vmatmul.mubr.f32.gmra.mxu0 %v193
  %v465 = vpop.f32.mrf.mxu0
  %v466 = vadd.f32 0.0, %v465
  %v467 = vpop.f32.mrf.mxu0
  %468 = vmatprep.mubr.f32.mxu0 0.0
  %469 = vmatmul.mubr.f32.gmra.mxu0 %v196
  %v470 = vpop.f32.mrf.mxu0
  %v471 = vadd.f32 0.0, %v470
  %v472 = vpop.f32.mrf.mxu0
  %473 = vmatprep.mubr.f32.mxu0 0.0
  %474 = vmatmul.mubr.f32.gmra.mxu0 %v199
  %v475 = vpop.f32.mrf.mxu0
  %v476 = vadd.f32 0.0, %v475
  %v477 = vpop.f32.mrf.mxu0
  %478 = vmatprep.mubr.f32.mxu0 0.0
  %479 = vmatmul.mubr.f32.gmra.mxu0 %v202
  %v480 = vpop.f32.mrf.mxu0
  %v481 = vadd.f32 0.0, %v480
  %v482 = vpop.f32.mrf.mxu0
  %483 = vdwg.mxu0
  %v484 = vlaneseq
  %v485 = vshrl.u32 %v484, 7
  %v486 = vadd.s32 %v485, 8
  %v487 = vadd.s32 %v485, 16
  %v488 = vadd.s32 %v485, 24
  %v489 = vadd.s32 %v485, 32
  %v490 = vadd.s32 %v485, 40
  %v491 = vadd.s32 %v485, 48
  %v492 = vadd.s32 %v485, 56
  %v493 = vadd.s32 %v485, 64
  %v494 = vadd.s32 %v485, 72
  %v495 = vadd.s32 %v485, 80
  %v496 = vadd.s32 %v485, 88
  %v497 = vadd.s32 %v485, 96
  %v498 = vadd.s32 %v485, 104
  %v499 = vadd.s32 %v485, 112
  %v500 = vadd.s32 %v485, 120
  %v501 = vadd.s32 %v485, 128
  %v502 = vadd.s32 %v485, 136
  %v503 = vadd.s32 %v485, 144
  %v504 = vadd.s32 %v485, 152
  %v505 = vadd.s32 %v485, 160
  %v506 = vadd.s32 %v485, 168
  %v507 = vadd.s32 %v485, 176
  %v508 = vadd.s32 %v485, 184
  %v509 = vadd.s32 %v485, 192
  %v510 = vadd.s32 %v485, 200
  %v511 = vadd.s32 %v485, 208
  %v512 = vadd.s32 %v485, 216
  %v513 = vadd.s32 %v485, 224
  %v514 = vadd.s32 %v485, 232
  %v515 = vadd.s32 %v485, 240
  %v516 = vadd.s32 %v485, 248
  %v517 = vadd.s32 %v485, 256
  %v518 = vadd.s32 %v485, 264
  %v519 = vadd.s32 %v485, 272
  %v520 = vadd.s32 %v485, 280
  %v521 = vadd.s32 %v485, 288
  %v522 = vadd.s32 %v485, 296
  %v523 = vadd.s32 %v485, 304
  %v524 = vadd.s32 %v485, 312
  %v525 = vadd.s32 %v485, 320
  %v526 = vadd.s32 %v485, 328
  %v527 = vadd.s32 %v485, 336
  %vm528 = vcmp.lt.s32.totalorder %v485, 338
  %vm529 = vcmp.lt.s32.totalorder %v486, 338
  %vm530 = vcmp.lt.s32.totalorder %v487, 338
  %vm531 = vcmp.lt.s32.totalorder %v488, 338
  %vm532 = vcmp.lt.s32.totalorder %v489, 338
  %vm533 = vcmp.lt.s32.totalorder %v490, 338
  %vm534 = vcmp.lt.s32.totalorder %v491, 338
  %vm535 = vcmp.lt.s32.totalorder %v492, 338
  %vm536 = vcmp.lt.s32.totalorder %v493, 338
  %vm537 = vcmp.lt.s32.totalorder %v494, 338
  %vm538 = vcmp.lt.s32.totalorder %v495, 338
  %vm539 = vcmp.lt.s32.totalorder %v496, 338
  %vm540 = vcmp.lt.s32.totalorder %v497, 338
  %vm541 = vcmp.lt.s32.totalorder %v498, 338
  %vm542 = vcmp.lt.s32.totalorder %v499, 338
  %vm543 = vcmp.lt.s32.totalorder %v500, 338
  %vm544 = vcmp.lt.s32.totalorder %v501, 338
  %vm545 = vcmp.lt.s32.totalorder %v502, 338
  %vm546 = vcmp.lt.s32.totalorder %v503, 338
  %vm547 = vcmp.lt.s32.totalorder %v504, 338
  %vm548 = vcmp.lt.s32.totalorder %v505, 338
  %vm549 = vcmp.lt.s32.totalorder %v506, 338
  %vm550 = vcmp.lt.s32.totalorder %v507, 338
  %vm551 = vcmp.lt.s32.totalorder %v508, 338
  %vm552 = vcmp.lt.s32.totalorder %v509, 338
  %vm553 = vcmp.lt.s32.totalorder %v510, 338
  %vm554 = vcmp.lt.s32.totalorder %v511, 338
  %vm555 = vcmp.lt.s32.totalorder %v512, 338
  %vm556 = vcmp.lt.s32.totalorder %v513, 338
  %vm557 = vcmp.lt.s32.totalorder %v514, 338
  %vm558 = vcmp.lt.s32.totalorder %v515, 338
  %vm559 = vcmp.lt.s32.totalorder %v516, 338
  %vm560 = vcmp.lt.s32.totalorder %v517, 338
  %vm561 = vcmp.lt.s32.totalorder %v518, 338
  %vm562 = vcmp.lt.s32.totalorder %v519, 338
  %vm563 = vcmp.lt.s32.totalorder %v520, 338
  %vm564 = vcmp.lt.s32.totalorder %v521, 338
  %vm565 = vcmp.lt.s32.totalorder %v522, 338
  %vm566 = vcmp.lt.s32.totalorder %v523, 338
  %vm567 = vcmp.lt.s32.totalorder %v524, 338
  %vm568 = vcmp.lt.s32.totalorder %v525, 338
  %vm569 = vcmp.lt.s32.totalorder %v526, 338
  %vm570 = vcmp.lt.s32.totalorder %v527, 338
  %v571 = vsel %vm74, %v271, 0.0
  %v572 = vsel %vm74, %v276, 0.0
  %v573 = vadd.f32 %v571, %v572
  %v574 = vsel %vm74, %v281, 0.0
  %v575 = vadd.f32 %v573, %v574
  %v576 = vsel %vm74, %v286, 0.0
  %v577 = vadd.f32 %v575, %v576
  %v578 = vsel %vm74, %v291, 0.0
  %v579 = vadd.f32 %v577, %v578
  %v580 = vsel %vm74, %v296, 0.0
  %v581 = vadd.f32 %v579, %v580
  %v582 = vsel %vm74, %v301, 0.0
  %v583 = vadd.f32 %v581, %v582
  %v584 = vsel %vm74, %v306, 0.0
  %v585 = vadd.f32 %v583, %v584
  %v586 = vsel %vm74, %v311, 0.0
  %v587 = vadd.f32 %v585, %v586
  %v588 = vsel %vm74, %v316, 0.0
  %v589 = vadd.f32 %v587, %v588
  %v590 = vsel %vm74, %v321, 0.0
  %v591 = vadd.f32 %v589, %v590
  %v592 = vsel %vm74, %v326, 0.0
  %v593 = vadd.f32 %v591, %v592
  %v594 = vsel %vm74, %v331, 0.0
  %v595 = vadd.f32 %v593, %v594
  %v596 = vsel %vm74, %v336, 0.0
  %v597 = vadd.f32 %v595, %v596
  %v598 = vsel %vm74, %v341, 0.0
  %v599 = vadd.f32 %v597, %v598
  %v600 = vsel %vm74, %v346, 0.0
  %v601 = vadd.f32 %v599, %v600
  %v602 = vsel %vm74, %v351, 0.0
  %v603 = vadd.f32 %v601, %v602
  %v604 = vsel %vm74, %v356, 0.0
  %v605 = vadd.f32 %v603, %v604
  %v606 = vsel %vm74, %v361, 0.0
  %v607 = vadd.f32 %v605, %v606
  %v608 = vsel %vm74, %v366, 0.0
  %v609 = vadd.f32 %v607, %v608
  %v610 = vsel %vm74, %v371, 0.0
  %v611 = vadd.f32 %v609, %v610
  %v612 = vsel %vm74, %v376, 0.0
  %v613 = vadd.f32 %v611, %v612
  %v614 = vsel %vm74, %v381, 0.0
  %v615 = vadd.f32 %v613, %v614
  %v616 = vsel %vm74, %v386, 0.0
  %v617 = vadd.f32 %v615, %v616
  %v618 = vsel %vm74, %v391, 0.0
  %v619 = vadd.f32 %v617, %v618
  %v620 = vsel %vm74, %v396, 0.0
  %v621 = vadd.f32 %v619, %v620
  %v622 = vsel %vm74, %v401, 0.0
  %v623 = vadd.f32 %v621, %v622
  %v624 = vsel %vm74, %v406, 0.0
  %v625 = vadd.f32 %v623, %v624
  %v626 = vsel %vm74, %v411, 0.0
  %v627 = vadd.f32 %v625, %v626
  %v628 = vsel %vm74, %v416, 0.0
  %v629 = vadd.f32 %v627, %v628
  %v630 = vsel %vm74, %v421, 0.0
  %v631 = vadd.f32 %v629, %v630
  %v632 = vsel %vm74, %v426, 0.0
  %v633 = vadd.f32 %v631, %v632
  %v634 = vsel %vm74, %v431, 0.0
  %v635 = vadd.f32 %v633, %v634
  %v636 = vsel %vm74, %v436, 0.0
  %v637 = vadd.f32 %v635, %v636
  %v638 = vsel %vm74, %v441, 0.0
  %v639 = vadd.f32 %v637, %v638
  %v640 = vsel %vm74, %v446, 0.0
  %v641 = vadd.f32 %v639, %v640
  %v642 = vsel %vm74, %v451, 0.0
  %v643 = vadd.f32 %v641, %v642
  %v644 = vsel %vm74, %v456, 0.0
  %v645 = vadd.f32 %v643, %v644
  %v646 = vsel %vm74, %v461, 0.0
  %v647 = vadd.f32 %v645, %v646
  %v648 = vsel %vm74, %v466, 0.0
  %v649 = vadd.f32 %v647, %v648
  %v650 = vsel %vm74, %v471, 0.0
  %v651 = vadd.f32 %v649, %v650
  %v652 = vsel %vm74, %v476, 0.0
  %v653 = vadd.f32 %v651, %v652
  %v654 = vsel %vm74, %v481, 0.0
  %v655 = vadd.f32 %v653, %v654
  %v656 = vrot.slane %v655, 4
  %v657 = vadd.f32 %v655, %v656
  %v658 = vrot.slane %v657, 2
  %v659 = vadd.f32 %v657, %v658
  %v660 = vrot.slane %v659, 1
  %v661 = vadd.f32 %v659, %v660
  %v662 = vmul.f32 %v661, 0.00295858
  %v663 = vsub.f32 %v271, %v662
  %v664 = vsub.f32 %v276, %v662
  %v665 = vsub.f32 %v281, %v662
  %v666 = vsub.f32 %v286, %v662
  %v667 = vsub.f32 %v291, %v662
  %v668 = vsub.f32 %v296, %v662
  %v669 = vsub.f32 %v301, %v662
  %v670 = vsub.f32 %v306, %v662
  %v671 = vsub.f32 %v311, %v662
  %v672 = vsub.f32 %v316, %v662
  %v673 = vsub.f32 %v321, %v662
  %v674 = vsub.f32 %v326, %v662
  %v675 = vsub.f32 %v331, %v662
  %v676 = vsub.f32 %v336, %v662
  %v677 = vsub.f32 %v341, %v662
  %v678 = vsub.f32 %v346, %v662
  %v679 = vsub.f32 %v351, %v662
  %v680 = vsub.f32 %v356, %v662
  %v681 = vsub.f32 %v361, %v662
  %v682 = vsub.f32 %v366, %v662
  %v683 = vsub.f32 %v371, %v662
  %v684 = vsub.f32 %v376, %v662
  %v685 = vsub.f32 %v381, %v662
  %v686 = vsub.f32 %v386, %v662
  %v687 = vsub.f32 %v391, %v662
  %v688 = vsub.f32 %v396, %v662
  %v689 = vsub.f32 %v401, %v662
  %v690 = vsub.f32 %v406, %v662
  %v691 = vsub.f32 %v411, %v662
  %v692 = vsub.f32 %v416, %v662
  %v693 = vsub.f32 %v421, %v662
  %v694 = vsub.f32 %v426, %v662
  %v695 = vsub.f32 %v431, %v662
  %v696 = vsub.f32 %v436, %v662
  %v697 = vsub.f32 %v441, %v662
  %v698 = vsub.f32 %v446, %v662
  %v699 = vsub.f32 %v451, %v662
  %v700 = vsub.f32 %v456, %v662
  %v701 = vsub.f32 %v461, %v662
  %v702 = vsub.f32 %v466, %v662
  %v703 = vsub.f32 %v471, %v662
  %v704 = vsub.f32 %v476, %v662
  %v705 = vsub.f32 %v481, %v662
  %v706 = vmul.f32 %v663, %v663
  %v707 = vmul.f32 %v664, %v664
  %v708 = vmul.f32 %v665, %v665
  %v709 = vmul.f32 %v666, %v666
  %v710 = vmul.f32 %v667, %v667
  %v711 = vmul.f32 %v668, %v668
  %v712 = vmul.f32 %v669, %v669
  %v713 = vmul.f32 %v670, %v670
  %v714 = vmul.f32 %v671, %v671
  %v715 = vmul.f32 %v672, %v672
  %v716 = vmul.f32 %v673, %v673
  %v717 = vmul.f32 %v674, %v674
  %v718 = vmul.f32 %v675, %v675
  %v719 = vmul.f32 %v676, %v676
  %v720 = vmul.f32 %v677, %v677
  %v721 = vmul.f32 %v678, %v678
  %v722 = vmul.f32 %v679, %v679
  %v723 = vmul.f32 %v680, %v680
  %v724 = vmul.f32 %v681, %v681
  %v725 = vmul.f32 %v682, %v682
  %v726 = vmul.f32 %v683, %v683
  %v727 = vmul.f32 %v684, %v684
  %v728 = vmul.f32 %v685, %v685
  %v729 = vmul.f32 %v686, %v686
  %v730 = vmul.f32 %v687, %v687
  %v731 = vmul.f32 %v688, %v688
  %v732 = vmul.f32 %v689, %v689
  %v733 = vmul.f32 %v690, %v690
  %v734 = vmul.f32 %v691, %v691
  %v735 = vmul.f32 %v692, %v692
  %v736 = vmul.f32 %v693, %v693
  %v737 = vmul.f32 %v694, %v694
  %v738 = vmul.f32 %v695, %v695
  %v739 = vmul.f32 %v696, %v696
  %v740 = vmul.f32 %v697, %v697
  %v741 = vmul.f32 %v698, %v698
  %v742 = vmul.f32 %v699, %v699
  %v743 = vmul.f32 %v700, %v700
  %v744 = vmul.f32 %v701, %v701
  %v745 = vmul.f32 %v702, %v702
  %v746 = vmul.f32 %v703, %v703
  %v747 = vmul.f32 %v704, %v704
  %v748 = vmul.f32 %v705, %v705
  %v749 = vsel %vm528, 1, 0
  %v750 = vsel %vm529, 1, 0
  %v751 = vsel %vm530, 1, 0
  %v752 = vsel %vm531, 1, 0
  %v753 = vsel %vm532, 1, 0
  %v754 = vsel %vm533, 1, 0
  %v755 = vsel %vm534, 1, 0
  %v756 = vsel %vm535, 1, 0
  %v757 = vsel %vm536, 1, 0
  %v758 = vsel %vm537, 1, 0
  %v759 = vsel %vm538, 1, 0
  %v760 = vsel %vm539, 1, 0
  %v761 = vsel %vm540, 1, 0
  %v762 = vsel %vm541, 1, 0
  %v763 = vsel %vm542, 1, 0
  %v764 = vsel %vm543, 1, 0
  %v765 = vsel %vm544, 1, 0
  %v766 = vsel %vm545, 1, 0
  %v767 = vsel %vm546, 1, 0
  %v768 = vsel %vm547, 1, 0
  %v769 = vsel %vm548, 1, 0
  %v770 = vsel %vm549, 1, 0
  %v771 = vsel %vm550, 1, 0
  %v772 = vsel %vm551, 1, 0
  %v773 = vsel %vm552, 1, 0
  %v774 = vsel %vm553, 1, 0
  %v775 = vsel %vm554, 1, 0
  %v776 = vsel %vm555, 1, 0
  %v777 = vsel %vm556, 1, 0
  %v778 = vsel %vm557, 1, 0
  %v779 = vsel %vm558, 1, 0
  %v780 = vsel %vm559, 1, 0
  %v781 = vsel %vm560, 1, 0
  %v782 = vsel %vm561, 1, 0
  %v783 = vsel %vm562, 1, 0
  %v784 = vsel %vm563, 1, 0
  %v785 = vsel %vm564, 1, 0
  %v786 = vsel %vm565, 1, 0
  %v787 = vsel %vm566, 1, 0
  %v788 = vsel %vm567, 1, 0
  %v789 = vsel %vm568, 1, 0
  %v790 = vsel %vm569, 1, 0
  %v791 = vsel %vm570, 1, 0
  %vm792 = vcmp.eq.s32.totalorder %v749, 1
  %vm793 = vcmp.eq.s32.totalorder %v750, 1
  %vm794 = vcmp.eq.s32.totalorder %v751, 1
  %vm795 = vcmp.eq.s32.totalorder %v752, 1
  %vm796 = vcmp.eq.s32.totalorder %v753, 1
  %vm797 = vcmp.eq.s32.totalorder %v754, 1
  %vm798 = vcmp.eq.s32.totalorder %v755, 1
  %vm799 = vcmp.eq.s32.totalorder %v756, 1
  %vm800 = vcmp.eq.s32.totalorder %v757, 1
  %vm801 = vcmp.eq.s32.totalorder %v758, 1
  %vm802 = vcmp.eq.s32.totalorder %v759, 1
  %vm803 = vcmp.eq.s32.totalorder %v760, 1
  %vm804 = vcmp.eq.s32.totalorder %v761, 1
  %vm805 = vcmp.eq.s32.totalorder %v762, 1
  %vm806 = vcmp.eq.s32.totalorder %v763, 1
  %vm807 = vcmp.eq.s32.totalorder %v764, 1
  %vm808 = vcmp.eq.s32.totalorder %v765, 1
  %vm809 = vcmp.eq.s32.totalorder %v766, 1
  %vm810 = vcmp.eq.s32.totalorder %v767, 1
  %vm811 = vcmp.eq.s32.totalorder %v768, 1
  %vm812 = vcmp.eq.s32.totalorder %v769, 1
  %vm813 = vcmp.eq.s32.totalorder %v770, 1
  %vm814 = vcmp.eq.s32.totalorder %v771, 1
  %vm815 = vcmp.eq.s32.totalorder %v772, 1
  %vm816 = vcmp.eq.s32.totalorder %v773, 1
  %vm817 = vcmp.eq.s32.totalorder %v774, 1
  %vm818 = vcmp.eq.s32.totalorder %v775, 1
  %vm819 = vcmp.eq.s32.totalorder %v776, 1
  %vm820 = vcmp.eq.s32.totalorder %v777, 1
  %vm821 = vcmp.eq.s32.totalorder %v778, 1
  %vm822 = vcmp.eq.s32.totalorder %v779, 1
  %vm823 = vcmp.eq.s32.totalorder %v780, 1
  %vm824 = vcmp.eq.s32.totalorder %v781, 1
  %vm825 = vcmp.eq.s32.totalorder %v782, 1
  %vm826 = vcmp.eq.s32.totalorder %v783, 1
  %vm827 = vcmp.eq.s32.totalorder %v784, 1
  %vm828 = vcmp.eq.s32.totalorder %v785, 1
  %vm829 = vcmp.eq.s32.totalorder %v786, 1
  %vm830 = vcmp.eq.s32.totalorder %v787, 1
  %vm831 = vcmp.eq.s32.totalorder %v788, 1
  %vm832 = vcmp.eq.s32.totalorder %v789, 1
  %vm833 = vcmp.eq.s32.totalorder %v790, 1
  %vm834 = vcmp.eq.s32.totalorder %v791, 1
  %v835 = vsel %vm792, %v706, 0.0
  %v836 = vsel %vm793, %v707, 0.0
  %v837 = vsel %vm794, %v708, 0.0
  %v838 = vsel %vm795, %v709, 0.0
  %v839 = vsel %vm796, %v710, 0.0
  %v840 = vsel %vm797, %v711, 0.0
  %v841 = vsel %vm798, %v712, 0.0
  %v842 = vsel %vm799, %v713, 0.0
  %v843 = vsel %vm800, %v714, 0.0
  %v844 = vsel %vm801, %v715, 0.0
  %v845 = vsel %vm802, %v716, 0.0
  %v846 = vsel %vm803, %v717, 0.0
  %v847 = vsel %vm804, %v718, 0.0
  %v848 = vsel %vm805, %v719, 0.0
  %v849 = vsel %vm806, %v720, 0.0
  %v850 = vsel %vm807, %v721, 0.0
  %v851 = vsel %vm808, %v722, 0.0
  %v852 = vsel %vm809, %v723, 0.0
  %v853 = vsel %vm810, %v724, 0.0
  %v854 = vsel %vm811, %v725, 0.0
  %v855 = vsel %vm812, %v726, 0.0
  %v856 = vsel %vm813, %v727, 0.0
  %v857 = vsel %vm814, %v728, 0.0
  %v858 = vsel %vm815, %v729, 0.0
  %v859 = vsel %vm816, %v730, 0.0
  %v860 = vsel %vm817, %v731, 0.0
  %v861 = vsel %vm818, %v732, 0.0
  %v862 = vsel %vm819, %v733, 0.0
  %v863 = vsel %vm820, %v734, 0.0
  %v864 = vsel %vm821, %v735, 0.0
  %v865 = vsel %vm822, %v736, 0.0
  %v866 = vsel %vm823, %v737, 0.0
  %v867 = vsel %vm824, %v738, 0.0
  %v868 = vsel %vm825, %v739, 0.0
  %v869 = vsel %vm826, %v740, 0.0
  %v870 = vsel %vm827, %v741, 0.0
  %v871 = vsel %vm828, %v742, 0.0
  %v872 = vsel %vm829, %v743, 0.0
  %v873 = vsel %vm830, %v744, 0.0
  %v874 = vsel %vm831, %v745, 0.0
  %v875 = vsel %vm832, %v746, 0.0
  %v876 = vsel %vm833, %v747, 0.0
  %v877 = vsel %vm834, %v748, 0.0
  %v878 = vsel %vm74, %v835, 0.0
  %v879 = vsel %vm74, %v836, 0.0
  %v880 = vadd.f32 %v878, %v879
  %v881 = vsel %vm74, %v837, 0.0
  %v882 = vadd.f32 %v880, %v881
  %v883 = vsel %vm74, %v838, 0.0
  %v884 = vadd.f32 %v882, %v883
  %v885 = vsel %vm74, %v839, 0.0
  %v886 = vadd.f32 %v884, %v885
  %v887 = vsel %vm74, %v840, 0.0
  %v888 = vadd.f32 %v886, %v887
  %v889 = vsel %vm74, %v841, 0.0
  %v890 = vadd.f32 %v888, %v889
  %v891 = vsel %vm74, %v842, 0.0
  %v892 = vadd.f32 %v890, %v891
  %v893 = vsel %vm74, %v843, 0.0
  %v894 = vadd.f32 %v892, %v893
  %v895 = vsel %vm74, %v844, 0.0
  %v896 = vadd.f32 %v894, %v895
  %v897 = vsel %vm74, %v845, 0.0
  %v898 = vadd.f32 %v896, %v897
  %v899 = vsel %vm74, %v846, 0.0
  %v900 = vadd.f32 %v898, %v899
  %v901 = vsel %vm74, %v847, 0.0
  %v902 = vadd.f32 %v900, %v901
  %v903 = vsel %vm74, %v848, 0.0
  %v904 = vadd.f32 %v902, %v903
  %v905 = vsel %vm74, %v849, 0.0
  %v906 = vadd.f32 %v904, %v905
  %v907 = vsel %vm74, %v850, 0.0
  %v908 = vadd.f32 %v906, %v907
  %v909 = vsel %vm74, %v851, 0.0
  %v910 = vadd.f32 %v908, %v909
  %v911 = vsel %vm74, %v852, 0.0
  %v912 = vadd.f32 %v910, %v911
  %v913 = vsel %vm74, %v853, 0.0
  %v914 = vadd.f32 %v912, %v913
  %v915 = vsel %vm74, %v854, 0.0
  %v916 = vadd.f32 %v914, %v915
  %v917 = vsel %vm74, %v855, 0.0
  %v918 = vadd.f32 %v916, %v917
  %v919 = vsel %vm74, %v856, 0.0
  %v920 = vadd.f32 %v918, %v919
  %v921 = vsel %vm74, %v857, 0.0
  %v922 = vadd.f32 %v920, %v921
  %v923 = vsel %vm74, %v858, 0.0
  %v924 = vadd.f32 %v922, %v923
  %v925 = vsel %vm74, %v859, 0.0
  %v926 = vadd.f32 %v924, %v925
  %v927 = vsel %vm74, %v860, 0.0
  %v928 = vadd.f32 %v926, %v927
  %v929 = vsel %vm74, %v861, 0.0
  %v930 = vadd.f32 %v928, %v929
  %v931 = vsel %vm74, %v862, 0.0
  %v932 = vadd.f32 %v930, %v931
  %v933 = vsel %vm74, %v863, 0.0
  %v934 = vadd.f32 %v932, %v933
  %v935 = vsel %vm74, %v864, 0.0
  %v936 = vadd.f32 %v934, %v935
  %v937 = vsel %vm74, %v865, 0.0
  %v938 = vadd.f32 %v936, %v937
  %v939 = vsel %vm74, %v866, 0.0
  %v940 = vadd.f32 %v938, %v939
  %v941 = vsel %vm74, %v867, 0.0
  %v942 = vadd.f32 %v940, %v941
  %v943 = vsel %vm74, %v868, 0.0
  %v944 = vadd.f32 %v942, %v943
  %v945 = vsel %vm74, %v869, 0.0
  %v946 = vadd.f32 %v944, %v945
  %v947 = vsel %vm74, %v870, 0.0
  %v948 = vadd.f32 %v946, %v947
  %v949 = vsel %vm74, %v871, 0.0
  %v950 = vadd.f32 %v948, %v949
  %v951 = vsel %vm74, %v872, 0.0
  %v952 = vadd.f32 %v950, %v951
  %v953 = vsel %vm74, %v873, 0.0
  %v954 = vadd.f32 %v952, %v953
  %v955 = vsel %vm74, %v874, 0.0
  %v956 = vadd.f32 %v954, %v955
  %v957 = vsel %vm74, %v875, 0.0
  %v958 = vadd.f32 %v956, %v957
  %v959 = vsel %vm74, %v876, 0.0
  %v960 = vadd.f32 %v958, %v959
  %v961 = vsel %vm74, %v877, 0.0
  %v962 = vadd.f32 %v960, %v961
  %v963 = vrot.slane %v962, 4
  %v964 = vadd.f32 %v962, %v963
  %v965 = vrot.slane %v964, 2
  %v966 = vadd.f32 %v964, %v965
  %v967 = vrot.slane %v966, 1
  %v968 = vadd.f32 %v966, %v967
  %v969 = vmul.f32 %v968, 0.00295858
  %v970 = vld [vmem:[%s7] sm:$0x1]
  %v971 = vadd.f32 %v969, 1e-05
  %v972 = vrsqrt.pop %v971
  %v973 = vmul.f32 %v970, %v972
  %v974 = vld [vmem:[%s7 + $0x1] sm:$0x1]
  %v975 = vmul.f32 %v662, %v973
  %v976 = vsub.f32 %v974, %v975
  %v978 = vrot.slane %v976, 7
  %vm980 = vcmask 1040384
  %v981 = vsel %vm980, %v973, %v978
  %v982 = vld [vmem:[%s5] sm:$0xff]
  %v983 = vld [vmem:[%s5 + $0x8] sm:$0xff]
  %v984 = vld [vmem:[%s5 + $0x10] sm:$0xff]
  %v985 = vld [vmem:[%s5 + $0x18] sm:$0xff]
  %v987 = vsel %vm74, %v981, 0
  %989 = vmatprep.subr.mxu0 0.0
  %990 = vmatpush1.msra.mxu0 0.0
  %991 = vmatprep.subr.mxu0 0.0
  %992 = vmatpush1.msra.mxu0 0.0
  %993 = vmatprep.subr.mxu0 0.0
  %994 = vmatpush1.msra.mxu0 0.0
  %995 = vmatprep.subr.mxu0 0.0
  %996 = vmatpush1.msra.mxu0 0.0
  %997 = vmatprep.subr.mxu0 0.0
  %998 = vmatpush1.msra.mxu0 0.0
  %999 = vmatprep.subr.mxu0 0.0
  %1000 = vmatpush1.msra.mxu0 0.0
  %1001 = vmatprep.subr.mxu0 0.0
  %1002 = vmatpush1.msra.mxu0 0.0
  %1003 = vmatprep.subr.mxu0 0.0
  %1004 = vmatpush1.msra.mxu0 0.0
  %1005 = vmatprep.subr.mxu0 0.0
  %1006 = vmatpush1.msra.mxu0 0.0
  %1007 = vmatprep.subr.mxu0 0.0
  %1008 = vmatpush1.msra.mxu0 0.0
  %1009 = vmatprep.subr.mxu0 0.0
  %1010 = vmatpush1.msra.mxu0 0.0
  %1011 = vmatprep.subr.mxu0 0.0
  %1012 = vmatpush1.msra.mxu0 0.0
  %1013 = vmatprep.subr.mxu0 0.0
  %1014 = vmatpush1.msra.mxu0 0.0
  %1015 = vmatprep.subr.mxu0 0.0
  %1016 = vmatpush1.msra.mxu0 0.0
  %1017 = vmatprep.subr.mxu0 %v985
  %1018 = vmatpush1.msra.mxu0 %v984
  %1019 = vmatprep.subr.mxu0 %v983
  %1020 = vmatpush1.msra.mxu0 %v982
  %1021 = vmatprep.subr.mxu0 0.0
  %1022 = vmatpush2.msra.mxu0 0.0
  %1023 = vmatprep.subr.mxu0 0.0
  %1024 = vmatpush2.msra.mxu0 0.0
  %1025 = vmatprep.subr.mxu0 0.0
  %1026 = vmatpush2.msra.mxu0 0.0
  %1027 = vmatprep.subr.mxu0 0.0
  %1028 = vmatpush2.msra.mxu0 0.0
  %1029 = vmatprep.subr.mxu0 0.0
  %1030 = vmatpush2.msra.mxu0 0.0
  %1031 = vmatprep.subr.mxu0 0.0
  %1032 = vmatpush2.msra.mxu0 0.0
  %1033 = vmatprep.subr.mxu0 0.0
  %1034 = vmatpush2.msra.mxu0 0.0
  %1035 = vmatprep.subr.mxu0 0.0
  %1036 = vmatpush2.msra.mxu0 0.0
  %1037 = vmatprep.subr.mxu0 0.0
  %1038 = vmatpush2.msra.mxu0 0.0
  %1039 = vmatprep.subr.mxu0 0.0
  %1040 = vmatpush2.msra.mxu0 0.0
  %1041 = vmatprep.subr.mxu0 0.0
  %1042 = vmatpush2.msra.mxu0 0.0
  %1043 = vmatprep.subr.mxu0 0.0
  %1044 = vmatpush2.msra.mxu0 0.0
  %1045 = vmatprep.subr.mxu0 0.0
  %1046 = vmatpush2.msra.mxu0 0.0
  %1047 = vmatprep.subr.mxu0 0.0
  %1048 = vmatpush2.msra.mxu0 0.0
  %1049 = vmatprep.subr.mxu0 0.0
  %1050 = vmatpush2.msra.mxu0 0.0
  %1051 = vmatprep.subr.mxu0 0.0
  %1052 = vmatpush2.msra.mxu0 0.0
  %1053 = vmatprep.mubr.f32.mxu0 0.0
  %1054 = vmatmul.mubr.f32.gmra.mxu0 %v987
  %v1055 = vpop.f32.mrf.mxu0
  %v1056 = vadd.f32 0.0, %v1055
  %v1057 = vpop.f32.mrf.mxu0
  %v1058 = vadd.f32 0.0, %v1057
  %1059 = vdwg.mxu0
  %v1060 = vld [vmem:[%s1] sm:$0xff]
  %v1061 = vld [vmem:[%s1 + $0x8] sm:$0xff]
  %v1062 = vld [vmem:[%s1 + $0x10] sm:$0xff]
  %v1063 = vld [vmem:[%s1 + $0x18] sm:$0xff]
  %v1064 = vld [vmem:[%s1 + $0x20] sm:$0xff]
  %v1065 = vld [vmem:[%s1 + $0x28] sm:$0xff]
  %v1066 = vld [vmem:[%s1 + $0x30] sm:$0xff]
  %v1067 = vld [vmem:[%s1 + $0x38] sm:$0xff]
  %v1068 = vld [vmem:[%s1 + $0x40] sm:$0xff]
  %v1069 = vld [vmem:[%s1 + $0x48] sm:$0xff]
  %v1070 = vld [vmem:[%s1 + $0x50] sm:$0xff]
  %v1071 = vld [vmem:[%s1 + $0x58] sm:$0xff]
  %v1072 = vld [vmem:[%s1 + $0x60] sm:$0xff]
  %v1073 = vld [vmem:[%s1 + $0x68] sm:$0xff]
  %v1074 = vld [vmem:[%s1 + $0x70] sm:$0xff]
  %v1075 = vld [vmem:[%s1 + $0x78] sm:$0xff]
  %v1076 = vld [vmem:[%s3] sm:$0xff]
  %v1077 = vld [vmem:[%s3 + $0x8] sm:$0xff]
  %v1078 = vld [vmem:[%s3 + $0x10] sm:$0xff]
  %v1079 = vld [vmem:[%s3 + $0x18] sm:$0xff]
  %v1080 = vld [vmem:[%s3 + $0x20] sm:$0xff]
  %v1081 = vld [vmem:[%s3 + $0x28] sm:$0xff]
  %v1082 = vld [vmem:[%s3 + $0x30] sm:$0xff]
  %v1083 = vld [vmem:[%s3 + $0x38] sm:$0xff]
  %v1084 = vld [vmem:[%s3 + $0x40] sm:$0xff]
  %v1085 = vld [vmem:[%s3 + $0x48] sm:$0xff]
  %v1086 = vld [vmem:[%s3 + $0x50] sm:$0xff]
  %v1087 = vld [vmem:[%s3 + $0x58] sm:$0xff]
  %v1088 = vld [vmem:[%s3 + $0x60] sm:$0xff]
  %v1089 = vld [vmem:[%s3 + $0x68] sm:$0xff]
  %v1090 = vld [vmem:[%s3 + $0x70] sm:$0xff]
  %v1091 = vld [vmem:[%s3 + $0x78] sm:$0xff]
  %v1092 = vld [vmem:[%s3 + $0x80] sm:$0xff]
  %v1093 = vld [vmem:[%s3 + $0x88] sm:$0xff]
  %v1094 = vld [vmem:[%s3 + $0x90] sm:$0xff]
  %v1095 = vld [vmem:[%s3 + $0x98] sm:$0xff]
  %v1096 = vld [vmem:[%s3 + $0xa0] sm:$0xff]
  %v1097 = vld [vmem:[%s3 + $0xa8] sm:$0xff]
  %v1098 = vld [vmem:[%s3 + $0xb0] sm:$0xff]
  %v1099 = vld [vmem:[%s3 + $0xb8] sm:$0xff]
  %v1100 = vld [vmem:[%s3 + $0xc0] sm:$0xff]
  %v1101 = vld [vmem:[%s3 + $0xc8] sm:$0xff]
  %v1102 = vld [vmem:[%s3 + $0xd0] sm:$0xff]
  %v1103 = vld [vmem:[%s3 + $0xd8] sm:$0xff]
  %v1104 = vld [vmem:[%s3 + $0xe0] sm:$0xff]
  %v1105 = vld [vmem:[%s3 + $0xe8] sm:$0xff]
  %v1106 = vld [vmem:[%s3 + $0xf0] sm:$0xff]
  %v1107 = vld [vmem:[%s3 + $0xf8] sm:$0xff]
  %v1108 = vld [vmem:[%s3 + $0x100] sm:$0xff]
  %v1109 = vld [vmem:[%s3 + $0x108] sm:$0xff]
  %v1110 = vld [vmem:[%s3 + $0x110] sm:$0xff]
  %v1111 = vld [vmem:[%s3 + $0x118] sm:$0xff]
  %v1112 = vld [vmem:[%s3 + $0x120] sm:$0xff]
  %v1113 = vld [vmem:[%s3 + $0x128] sm:$0xff]
  %v1114 = vld [vmem:[%s3 + $0x130] sm:$0xff]
  %v1115 = vld [vmem:[%s3 + $0x138] sm:$0xff]
  %v1116 = vld [vmem:[%s3 + $0x140] sm:$0xff]
  %v1117 = vld [vmem:[%s3 + $0x148] sm:$0xff]
  %v1118 = vld [vmem:[%s3 + $0x150] sm:$0xff]
  %v1119 = vld [vmem:[%s3 + $0x158] sm:$0xff]
  %v1120 = vld [vmem:[%s3 + $0x160] sm:$0xff]
  %v1121 = vld [vmem:[%s3 + $0x168] sm:$0xff]
  %v1122 = vld [vmem:[%s3 + $0x170] sm:$0xff]
  %v1123 = vld [vmem:[%s3 + $0x178] sm:$0xff]
  %v1124 = vld [vmem:[%s3 + $0x180] sm:$0xff]
  %v1125 = vld [vmem:[%s3 + $0x188] sm:$0xff]
  %v1126 = vld [vmem:[%s3 + $0x190] sm:$0xff]
  %v1127 = vld [vmem:[%s3 + $0x198] sm:$0xff]
  %v1128 = vld [vmem:[%s3 + $0x1a0] sm:$0xff]
  %v1129 = vld [vmem:[%s3 + $0x1a8] sm:$0xff]
  %v1130 = vld [vmem:[%s3 + $0x1b0] sm:$0xff]
  %v1131 = vld [vmem:[%s3 + $0x1b8] sm:$0xff]
  %v1132 = vld [vmem:[%s3 + $0x1c0] sm:$0xff]
  %v1133 = vld [vmem:[%s3 + $0x1c8] sm:$0xff]
  %v1134 = vld [vmem:[%s3 + $0x1d0] sm:$0xff]
  %v1135 = vld [vmem:[%s3 + $0x1d8] sm:$0xff]
  %v1136 = vld [vmem:[%s3 + $0x1e0] sm:$0xff]
  %v1137 = vld [vmem:[%s3 + $0x1e8] sm:$0xff]
  %v1138 = vld [vmem:[%s3 + $0x1f0] sm:$0xff]
  %v1139 = vld [vmem:[%s3 + $0x1f8] sm:$0xff]
  %1140 = vmatprep.subr.mxu0 %v1107
  %1141 = vmatpush1.msra.mxu0 %v1106
  %1142 = vmatprep.subr.mxu0 %v1105
  %1143 = vmatpush1.msra.mxu0 %v1104
  %1144 = vmatprep.subr.mxu0 %v1103
  %1145 = vmatpush1.msra.mxu0 %v1102
  %1146 = vmatprep.subr.mxu0 %v1101
  %1147 = vmatpush1.msra.mxu0 %v1100
  %1148 = vmatprep.subr.mxu0 %v1099
  %1149 = vmatpush1.msra.mxu0 %v1098
  %1150 = vmatprep.subr.mxu0 %v1097
  %1151 = vmatpush1.msra.mxu0 %v1096
  %1152 = vmatprep.subr.mxu0 %v1095
  %1153 = vmatpush1.msra.mxu0 %v1094
  %1154 = vmatprep.subr.mxu0 %v1093
  %1155 = vmatpush1.msra.mxu0 %v1092
  %1156 = vmatprep.subr.mxu0 %v1091
  %1157 = vmatpush1.msra.mxu0 %v1090
  %1158 = vmatprep.subr.mxu0 %v1089
  %1159 = vmatpush1.msra.mxu0 %v1088
  %1160 = vmatprep.subr.mxu0 %v1087
  %1161 = vmatpush1.msra.mxu0 %v1086
  %1162 = vmatprep.subr.mxu0 %v1085
  %1163 = vmatpush1.msra.mxu0 %v1084
  %1164 = vmatprep.subr.mxu0 %v1083
  %1165 = vmatpush1.msra.mxu0 %v1082
  %1166 = vmatprep.subr.mxu0 %v1081
  %1167 = vmatpush1.msra.mxu0 %v1080
  %1168 = vmatprep.subr.mxu0 %v1079
  %1169 = vmatpush1.msra.mxu0 %v1078
  %1170 = vmatprep.subr.mxu0 %v1077
  %1171 = vmatpush1.msra.mxu0 %v1076
  %1172 = vmatprep.subr.mxu0 %v1139
  %1173 = vmatpush2.msra.mxu0 %v1138
  %1174 = vmatprep.subr.mxu0 %v1137
  %1175 = vmatpush2.msra.mxu0 %v1136
  %1176 = vmatprep.subr.mxu0 %v1135
  %1177 = vmatpush2.msra.mxu0 %v1134
  %1178 = vmatprep.subr.mxu0 %v1133
  %1179 = vmatpush2.msra.mxu0 %v1132
  %1180 = vmatprep.subr.mxu0 %v1131
  %1181 = vmatpush2.msra.mxu0 %v1130
  %1182 = vmatprep.subr.mxu0 %v1129
  %1183 = vmatpush2.msra.mxu0 %v1128
  %1184 = vmatprep.subr.mxu0 %v1127
  %1185 = vmatpush2.msra.mxu0 %v1126
  %1186 = vmatprep.subr.mxu0 %v1125
  %1187 = vmatpush2.msra.mxu0 %v1124
  %1188 = vmatprep.subr.mxu0 %v1123
  %1189 = vmatpush2.msra.mxu0 %v1122
  %1190 = vmatprep.subr.mxu0 %v1121
  %1191 = vmatpush2.msra.mxu0 %v1120
  %1192 = vmatprep.subr.mxu0 %v1119
  %1193 = vmatpush2.msra.mxu0 %v1118
  %1194 = vmatprep.subr.mxu0 %v1117
  %1195 = vmatpush2.msra.mxu0 %v1116
  %1196 = vmatprep.subr.mxu0 %v1115
  %1197 = vmatpush2.msra.mxu0 %v1114
  %1198 = vmatprep.subr.mxu0 %v1113
  %1199 = vmatpush2.msra.mxu0 %v1112
  %1200 = vmatprep.subr.mxu0 %v1111
  %1201 = vmatpush2.msra.mxu0 %v1110
  %1202 = vmatprep.subr.mxu0 %v1109
  %1203 = vmatpush2.msra.mxu0 %v1108
  %1204 = vmatprep.mubr.f32.mxu0 %v1061
  %1205 = vmatmul.mubr.f32.gmra.mxu0 %v1060
  %v1206 = vpop.f32.mrf.mxu0
  %v1207 = vadd.f32 0.0, %v1206
  %v1208 = vpop.f32.mrf.mxu0
  %v1209 = vadd.f32 0.0, %v1208
  %1210 = vmatprep.mubr.f32.mxu0 %v1063
  %1211 = vmatmul.mubr.f32.gmra.mxu0 %v1062
  %v1212 = vpop.f32.mrf.mxu0
  %v1213 = vadd.f32 0.0, %v1212
  %v1214 = vpop.f32.mrf.mxu0
  %v1215 = vadd.f32 0.0, %v1214
  %1216 = vmatprep.mubr.f32.mxu0 %v1065
  %1217 = vmatmul.mubr.f32.gmra.mxu0 %v1064
  %v1218 = vpop.f32.mrf.mxu0
  %v1219 = vadd.f32 0.0, %v1218
  %v1220 = vpop.f32.mrf.mxu0
  %v1221 = vadd.f32 0.0, %v1220
  %1222 = vmatprep.mubr.f32.mxu0 %v1067
  %1223 = vmatmul.mubr.f32.gmra.mxu0 %v1066
  %v1224 = vpop.f32.mrf.mxu0
  %v1225 = vadd.f32 0.0, %v1224
  %v1226 = vpop.f32.mrf.mxu0
  %v1227 = vadd.f32 0.0, %v1226
  %1228 = vmatprep.mubr.f32.mxu0 %v1069
  %1229 = vmatmul.mubr.f32.gmra.mxu0 %v1068
  %v1230 = vpop.f32.mrf.mxu0
  %v1231 = vadd.f32 0.0, %v1230
  %v1232 = vpop.f32.mrf.mxu0
  %v1233 = vadd.f32 0.0, %v1232
  %1234 = vmatprep.mubr.f32.mxu0 %v1071
  %1235 = vmatmul.mubr.f32.gmra.mxu0 %v1070
  %v1236 = vpop.f32.mrf.mxu0
  %v1237 = vadd.f32 0.0, %v1236
  %v1238 = vpop.f32.mrf.mxu0
  %v1239 = vadd.f32 0.0, %v1238
  %1240 = vmatprep.mubr.f32.mxu0 %v1073
  %1241 = vmatmul.mubr.f32.gmra.mxu0 %v1072
  %v1242 = vpop.f32.mrf.mxu0
  %v1243 = vadd.f32 0.0, %v1242
  %v1244 = vpop.f32.mrf.mxu0
  %v1245 = vadd.f32 0.0, %v1244
  %1246 = vmatprep.mubr.f32.mxu0 %v1075
  %1247 = vmatmul.mubr.f32.gmra.mxu0 %v1074
  %v1248 = vpop.f32.mrf.mxu0
  %v1249 = vadd.f32 0.0, %v1248
  %v1250 = vpop.f32.mrf.mxu0
  %v1251 = vadd.f32 0.0, %v1250
  %1252 = vdwg.mxu0
  %v1253 = vlaneseq
  %v1254 = vshrl.u32 %v1253, 7
  %v1255 = vsub.s32 0, %v1254
  %v1256 = vrot.slane %v1056, %v1255
  %v1257 = vlaneseq
  %v1258 = vshrl.u32 %v1257, 7
  %v1259 = vsub.s32 0, %v1258
  %v1260 = vrot.slane %v1058, %v1259
  %v1261 = vmul.f32 %v1207, %v1256
  %v1262 = vmul.f32 %v1209, %v1260
  %v1263 = vmul.f32 %v1213, %v1256
  %v1264 = vmul.f32 %v1215, %v1260
  %v1265 = vmul.f32 %v1219, %v1256
  %v1266 = vmul.f32 %v1221, %v1260
  %v1267 = vmul.f32 %v1225, %v1256
  %v1268 = vmul.f32 %v1227, %v1260
  %v1269 = vmul.f32 %v1231, %v1256
  %v1270 = vmul.f32 %v1233, %v1260
  %v1271 = vmul.f32 %v1237, %v1256
  %v1272 = vmul.f32 %v1239, %v1260
  %v1273 = vmul.f32 %v1243, %v1256
  %v1274 = vmul.f32 %v1245, %v1260
  %v1275 = vmul.f32 %v1249, %v1256
  %v1276 = vmul.f32 %v1251, %v1260
  %v1277 = vlaneseq
  %v1278 = vshrl.u32 %v1277, 7
  %v1279 = vsub.s32 1, %v1278
  %v1280 = vrot.slane %v1056, %v1279
  %v1281 = vlaneseq
  %v1282 = vshrl.u32 %v1281, 7
  %v1283 = vsub.s32 1, %v1282
  %v1284 = vrot.slane %v1058, %v1283
  %v1285 = vadd.f32 %v1261, %v1280
  %v1286 = vadd.f32 %v1262, %v1284
  %v1287 = vadd.f32 %v1263, %v1280
  %v1288 = vadd.f32 %v1264, %v1284
  %v1289 = vadd.f32 %v1265, %v1280
  %v1290 = vadd.f32 %v1266, %v1284
  %v1291 = vadd.f32 %v1267, %v1280
  %v1292 = vadd.f32 %v1268, %v1284
  %v1293 = vadd.f32 %v1269, %v1280
  %v1294 = vadd.f32 %v1270, %v1284
  %v1295 = vadd.f32 %v1271, %v1280
  %v1296 = vadd.f32 %v1272, %v1284
  %v1297 = vadd.f32 %v1273, %v1280
  %v1298 = vadd.f32 %v1274, %v1284
  %v1299 = vadd.f32 %v1275, %v1280
  %v1300 = vadd.f32 %v1276, %v1284
  %vm1301 = vcmp.ge.f32.partialorder %v1285, 0.0
  %vm1302 = vcmp.ge.f32.partialorder %v1286, 0.0
  %vm1303 = vcmp.ge.f32.partialorder %v1287, 0.0
  %vm1304 = vcmp.ge.f32.partialorder %v1288, 0.0
  %vm1305 = vcmp.ge.f32.partialorder %v1289, 0.0
  %vm1306 = vcmp.ge.f32.partialorder %v1290, 0.0
  %vm1307 = vcmp.ge.f32.partialorder %v1291, 0.0
  %vm1308 = vcmp.ge.f32.partialorder %v1292, 0.0
  %vm1309 = vcmp.ge.f32.partialorder %v1293, 0.0
  %vm1310 = vcmp.ge.f32.partialorder %v1294, 0.0
  %vm1311 = vcmp.ge.f32.partialorder %v1295, 0.0
  %vm1312 = vcmp.ge.f32.partialorder %v1296, 0.0
  %vm1313 = vcmp.ge.f32.partialorder %v1297, 0.0
  %vm1314 = vcmp.ge.f32.partialorder %v1298, 0.0
  %vm1315 = vcmp.ge.f32.partialorder %v1299, 0.0
  %vm1316 = vcmp.ge.f32.partialorder %v1300, 0.0
  %v1317 = vmul.f32 %v1285, 0.2
  %v1318 = vmul.f32 %v1286, 0.2
  %v1319 = vmul.f32 %v1287, 0.2
  %v1320 = vmul.f32 %v1288, 0.2
  %v1321 = vmul.f32 %v1289, 0.2
  %v1322 = vmul.f32 %v1290, 0.2
  %v1323 = vmul.f32 %v1291, 0.2
  %v1324 = vmul.f32 %v1292, 0.2
  %v1325 = vmul.f32 %v1293, 0.2
  %v1326 = vmul.f32 %v1294, 0.2
  %v1327 = vmul.f32 %v1295, 0.2
  %v1328 = vmul.f32 %v1296, 0.2
  %v1329 = vmul.f32 %v1297, 0.2
  %v1330 = vmul.f32 %v1298, 0.2
  %v1331 = vmul.f32 %v1299, 0.2
  %v1332 = vmul.f32 %v1300, 0.2
  %v1333 = vsel %vm1301, %v1285, %v1317
  %v1334 = vsel %vm1302, %v1286, %v1318
  %v1335 = vsel %vm1303, %v1287, %v1319
  %v1336 = vsel %vm1304, %v1288, %v1320
  %v1337 = vsel %vm1305, %v1289, %v1321
  %v1338 = vsel %vm1306, %v1290, %v1322
  %v1339 = vsel %vm1307, %v1291, %v1323
  %v1340 = vsel %vm1308, %v1292, %v1324
  %v1341 = vsel %vm1309, %v1293, %v1325
  %v1342 = vsel %vm1310, %v1294, %v1326
  %v1343 = vsel %vm1311, %v1295, %v1327
  %v1344 = vsel %vm1312, %v1296, %v1328
  %v1345 = vsel %vm1313, %v1297, %v1329
  %v1346 = vsel %vm1314, %v1298, %v1330
  %v1347 = vsel %vm1315, %v1299, %v1331
  %v1348 = vsel %vm1316, %v1300, %v1332
  %v1349 = vld [vmem:[%s4] sm:$0xff]
  %v1350 = vld [vmem:[%s4 + $0x8] sm:$0xff]
  %v1351 = vld [vmem:[%s4 + $0x10] sm:$0xff]
  %v1352 = vld [vmem:[%s4 + $0x18] sm:$0xff]
  %v1353 = vld [vmem:[%s4 + $0x20] sm:$0xff]
  %v1354 = vld [vmem:[%s4 + $0x28] sm:$0xff]
  %v1355 = vld [vmem:[%s4 + $0x30] sm:$0xff]
  %v1356 = vld [vmem:[%s4 + $0x38] sm:$0xff]
  %v1357 = vld [vmem:[%s4 + $0x40] sm:$0xff]
  %v1358 = vld [vmem:[%s4 + $0x48] sm:$0xff]
  %v1359 = vld [vmem:[%s4 + $0x50] sm:$0xff]
  %v1360 = vld [vmem:[%s4 + $0x58] sm:$0xff]
  %v1361 = vld [vmem:[%s4 + $0x60] sm:$0xff]
  %v1362 = vld [vmem:[%s4 + $0x68] sm:$0xff]
  %v1363 = vld [vmem:[%s4 + $0x70] sm:$0xff]
  %v1364 = vld [vmem:[%s4 + $0x78] sm:$0xff]
  %v1365 = vld [vmem:[%s4 + $0x80] sm:$0xff]
  %v1366 = vld [vmem:[%s4 + $0x88] sm:$0xff]
  %v1367 = vld [vmem:[%s4 + $0x90] sm:$0xff]
  %v1368 = vld [vmem:[%s4 + $0x98] sm:$0xff]
  %v1369 = vld [vmem:[%s4 + $0xa0] sm:$0xff]
  %v1370 = vld [vmem:[%s4 + $0xa8] sm:$0xff]
  %v1371 = vld [vmem:[%s4 + $0xb0] sm:$0xff]
  %v1372 = vld [vmem:[%s4 + $0xb8] sm:$0xff]
  %v1373 = vld [vmem:[%s4 + $0xc0] sm:$0xff]
  %v1374 = vld [vmem:[%s4 + $0xc8] sm:$0xff]
  %v1375 = vld [vmem:[%s4 + $0xd0] sm:$0xff]
  %v1376 = vld [vmem:[%s4 + $0xd8] sm:$0xff]
  %v1377 = vld [vmem:[%s4 + $0xe0] sm:$0xff]
  %v1378 = vld [vmem:[%s4 + $0xe8] sm:$0xff]
  %v1379 = vld [vmem:[%s4 + $0xf0] sm:$0xff]
  %v1380 = vld [vmem:[%s4 + $0xf8] sm:$0xff]
  %1381 = vmatprep.subr.mxu0 0.0
  %1382 = vmatpush1.msra.mxu0 %v1364
  %1383 = vmatprep.subr.mxu0 0.0
  %1384 = vmatpush1.msra.mxu0 %v1363
  %1385 = vmatprep.subr.mxu0 0.0
  %1386 = vmatpush1.msra.mxu0 %v1362
  %1387 = vmatprep.subr.mxu0 0.0
  %1388 = vmatpush1.msra.mxu0 %v1361
  %1389 = vmatprep.subr.mxu0 0.0
  %1390 = vmatpush1.msra.mxu0 %v1360
  %1391 = vmatprep.subr.mxu0 0.0
  %1392 = vmatpush1.msra.mxu0 %v1359
  %1393 = vmatprep.subr.mxu0 0.0
  %1394 = vmatpush1.msra.mxu0 %v1358
  %1395 = vmatprep.subr.mxu0 0.0
  %1396 = vmatpush1.msra.mxu0 %v1357
  %1397 = vmatprep.subr.mxu0 0.0
  %1398 = vmatpush1.msra.mxu0 %v1356
  %1399 = vmatprep.subr.mxu0 0.0
  %1400 = vmatpush1.msra.mxu0 %v1355
  %1401 = vmatprep.subr.mxu0 0.0
  %1402 = vmatpush1.msra.mxu0 %v1354
  %1403 = vmatprep.subr.mxu0 0.0
  %1404 = vmatpush1.msra.mxu0 %v1353
  %1405 = vmatprep.subr.mxu0 0.0
  %1406 = vmatpush1.msra.mxu0 %v1352
  %1407 = vmatprep.subr.mxu0 0.0
  %1408 = vmatpush1.msra.mxu0 %v1351
  %1409 = vmatprep.subr.mxu0 0.0
  %1410 = vmatpush1.msra.mxu0 %v1350
  %1411 = vmatprep.subr.mxu0 0.0
  %1412 = vmatpush1.msra.mxu0 %v1349
  %1413 = vmatprep.subr.mxu0 0.0
  %1414 = vmatpush2.msra.mxu0 %v1380
  %1415 = vmatprep.subr.mxu0 0.0
  %1416 = vmatpush2.msra.mxu0 %v1379
  %1417 = vmatprep.subr.mxu0 0.0
  %1418 = vmatpush2.msra.mxu0 %v1378
  %1419 = vmatprep.subr.mxu0 0.0
  %1420 = vmatpush2.msra.mxu0 %v1377
  %1421 = vmatprep.subr.mxu0 0.0
  %1422 = vmatpush2.msra.mxu0 %v1376
  %1423 = vmatprep.subr.mxu0 0.0
  %1424 = vmatpush2.msra.mxu0 %v1375
  %1425 = vmatprep.subr.mxu0 0.0
  %1426 = vmatpush2.msra.mxu0 %v1374
  %1427 = vmatprep.subr.mxu0 0.0
  %1428 = vmatpush2.msra.mxu0 %v1373
  %1429 = vmatprep.subr.mxu0 0.0
  %1430 = vmatpush2.msra.mxu0 %v1372
  %1431 = vmatprep.subr.mxu0 0.0
  %1432 = vmatpush2.msra.mxu0 %v1371
  %1433 = vmatprep.subr.mxu0 0.0
  %1434 = vmatpush2.msra.mxu0 %v1370
  %1435 = vmatprep.subr.mxu0 0.0
  %1436 = vmatpush2.msra.mxu0 %v1369
  %1437 = vmatprep.subr.mxu0 0.0
  %1438 = vmatpush2.msra.mxu0 %v1368
  %1439 = vmatprep.subr.mxu0 0.0
  %1440 = vmatpush2.msra.mxu0 %v1367
  %1441 = vmatprep.subr.mxu0 0.0
  %1442 = vmatpush2.msra.mxu0 %v1366
  %1443 = vmatprep.subr.mxu0 0.0
  %1444 = vmatpush2.msra.mxu0 %v1365
  %1445 = vmatprep.mubr.f32.mxu0 %v1334
  %1446 = vmatmul.mubr.f32.gmra.mxu0 %v1333
  %v1447 = vpop.f32.mrf.mxu0
  %v1448 = vadd.f32 0.0, %v1447
  %v1449 = vpop.f32.mrf.mxu0
  %1450 = vmatprep.mubr.f32.mxu0 %v1336
  %1451 = vmatmul.mubr.f32.gmra.mxu0 %v1335
  %v1452 = vpop.f32.mrf.mxu0
  %v1453 = vadd.f32 0.0, %v1452
  %v1454 = vpop.f32.mrf.mxu0
  %1455 = vmatprep.mubr.f32.mxu0 %v1338
  %1456 = vmatmul.mubr.f32.gmra.mxu0 %v1337
  %v1457 = vpop.f32.mrf.mxu0
  %v1458 = vadd.f32 0.0, %v1457
  %v1459 = vpop.f32.mrf.mxu0
  %1460 = vmatprep.mubr.f32.mxu0 %v1340
  %1461 = vmatmul.mubr.f32.gmra.mxu0 %v1339
  %v1462 = vpop.f32.mrf.mxu0
  %v1463 = vadd.f32 0.0, %v1462
  %v1464 = vpop.f32.mrf.mxu0
  %1465 = vmatprep.mubr.f32.mxu0 %v1342
  %1466 = vmatmul.mubr.f32.gmra.mxu0 %v1341
  %v1467 = vpop.f32.mrf.mxu0
  %v1468 = vadd.f32 0.0, %v1467
  %v1469 = vpop.f32.mrf.mxu0
  %1470 = vmatprep.mubr.f32.mxu0 %v1344
  %1471 = vmatmul.mubr.f32.gmra.mxu0 %v1343
  %v1472 = vpop.f32.mrf.mxu0
  %v1473 = vadd.f32 0.0, %v1472
  %v1474 = vpop.f32.mrf.mxu0
  %1475 = vmatprep.mubr.f32.mxu0 %v1346
  %1476 = vmatmul.mubr.f32.gmra.mxu0 %v1345
  %v1477 = vpop.f32.mrf.mxu0
  %v1478 = vadd.f32 0.0, %v1477
  %v1479 = vpop.f32.mrf.mxu0
  %1480 = vmatprep.mubr.f32.mxu0 %v1348
  %1481 = vmatmul.mubr.f32.gmra.mxu0 %v1347
  %v1482 = vpop.f32.mrf.mxu0
  %v1483 = vadd.f32 0.0, %v1482
  %v1484 = vpop.f32.mrf.mxu0
  %1485 = vdwg.mxu0
  %v1486 = vand.u32 %v485, 31
  %v1487 = vand.u32 %v486, 31
  %v1488 = vand.u32 %v487, 31
  %v1489 = vand.u32 %v488, 31
  %v1490 = vand.u32 %v489, 31
  %v1491 = vand.u32 %v490, 31
  %v1492 = vand.u32 %v491, 31
  %v1493 = vand.u32 %v492, 31
  %vm1494 = vcmp.lt.s32.totalorder %v1486, 25
  %vm1495 = vcmp.lt.s32.totalorder %v1487, 25
  %vm1496 = vcmp.lt.s32.totalorder %v1488, 25
  %vm1497 = vcmp.lt.s32.totalorder %v1489, 25
  %vm1498 = vcmp.lt.s32.totalorder %v1490, 25
  %vm1499 = vcmp.lt.s32.totalorder %v1491, 25
  %vm1500 = vcmp.lt.s32.totalorder %v1492, 25
  %vm1501 = vcmp.lt.s32.totalorder %v1493, 25
  %v1502 = vsel %vm1494, 1, 0
  %v1503 = vsel %vm1495, 1, 0
  %v1504 = vsel %vm1496, 1, 0
  %v1505 = vsel %vm1497, 1, 0
  %v1506 = vsel %vm1498, 1, 0
  %v1507 = vsel %vm1499, 1, 0
  %v1508 = vsel %vm1500, 1, 0
  %v1509 = vsel %vm1501, 1, 0
  %vm1510 = vcmp.eq.s32.totalorder %v1502, 1
  %vm1511 = vcmp.eq.s32.totalorder %v1503, 1
  %vm1512 = vcmp.eq.s32.totalorder %v1504, 1
  %vm1513 = vcmp.eq.s32.totalorder %v1505, 1
  %vm1514 = vcmp.eq.s32.totalorder %v1506, 1
  %vm1515 = vcmp.eq.s32.totalorder %v1507, 1
  %vm1516 = vcmp.eq.s32.totalorder %v1508, 1
  %vm1517 = vcmp.eq.s32.totalorder %v1509, 1
  %v1518 = vsel %vm1510, %v1448, 0.0
  %v1519 = vsel %vm1511, %v1453, 0.0
  %v1520 = vsel %vm1512, %v1458, 0.0
  %v1521 = vsel %vm1513, %v1463, 0.0
  %v1522 = vsel %vm1514, %v1468, 0.0
  %v1523 = vsel %vm1515, %v1473, 0.0
  %v1524 = vsel %vm1516, %v1478, 0.0
  %v1525 = vsel %vm1517, %v1483, 0.0
  %vm1526 = vcmask 261120
  %v1527 = vsel %vm1526, %v1518, 0.0
  %v1528 = vsel %vm1526, %v1519, 0.0
  %v1529 = vadd.f32 %v1527, %v1528
  %v1530 = vsel %vm1526, %v1520, 0.0
  %v1531 = vadd.f32 %v1529, %v1530
  %v1532 = vsel %vm1526, %v1521, 0.0
  %v1533 = vadd.f32 %v1531, %v1532
  %v1534 = vsel %vm1526, %v1522, 0.0
  %v1535 = vadd.f32 %v1533, %v1534
  %v1536 = vsel %vm1526, %v1523, 0.0
  %v1537 = vadd.f32 %v1535, %v1536
  %v1538 = vsel %vm1526, %v1524, 0.0
  %v1539 = vadd.f32 %v1537, %v1538
  %v1540 = vsel %vm1526, %v1525, 0.0
  %v1541 = vadd.f32 %v1539, %v1540
  %v1542 = vrot.slane %v1541, 4
  %v1543 = vadd.f32 %v1541, %v1542
  %v1544 = vrot.slane %v1543, 2
  %v1545 = vadd.f32 %v1543, %v1544
  %v1546 = vrot.slane %v1545, 1
  %v1547 = vadd.f32 %v1545, %v1546
  %v1548 = vmul.f32 %v1547, 0.02
  %v1549 = vsub.f32 %v1448, %v1548
  %v1550 = vsub.f32 %v1453, %v1548
  %v1551 = vsub.f32 %v1458, %v1548
  %v1552 = vsub.f32 %v1463, %v1548
  %v1553 = vsub.f32 %v1468, %v1548
  %v1554 = vsub.f32 %v1473, %v1548
  %v1555 = vsub.f32 %v1478, %v1548
  %v1556 = vsub.f32 %v1483, %v1548
  %v1557 = vmul.f32 %v1549, %v1549
  %v1558 = vmul.f32 %v1550, %v1550
  %v1559 = vmul.f32 %v1551, %v1551
  %v1560 = vmul.f32 %v1552, %v1552
  %v1561 = vmul.f32 %v1553, %v1553
  %v1562 = vmul.f32 %v1554, %v1554
  %v1563 = vmul.f32 %v1555, %v1555
  %v1564 = vmul.f32 %v1556, %v1556
  %v1565 = vsel %vm1510, %v1557, 0.0
  %v1566 = vsel %vm1511, %v1558, 0.0
  %v1567 = vsel %vm1512, %v1559, 0.0
  %v1568 = vsel %vm1513, %v1560, 0.0
  %v1569 = vsel %vm1514, %v1561, 0.0
  %v1570 = vsel %vm1515, %v1562, 0.0
  %v1571 = vsel %vm1516, %v1563, 0.0
  %v1572 = vsel %vm1517, %v1564, 0.0
  %v1573 = vsel %vm1526, %v1565, 0.0
  %v1574 = vsel %vm1526, %v1566, 0.0
  %v1575 = vadd.f32 %v1573, %v1574
  %v1576 = vsel %vm1526, %v1567, 0.0
  %v1577 = vadd.f32 %v1575, %v1576
  %v1578 = vsel %vm1526, %v1568, 0.0
  %v1579 = vadd.f32 %v1577, %v1578
  %v1580 = vsel %vm1526, %v1569, 0.0
  %v1581 = vadd.f32 %v1579, %v1580
  %v1582 = vsel %vm1526, %v1570, 0.0
  %v1583 = vadd.f32 %v1581, %v1582
  %v1584 = vsel %vm1526, %v1571, 0.0
  %v1585 = vadd.f32 %v1583, %v1584
  %v1586 = vsel %vm1526, %v1572, 0.0
  %v1587 = vadd.f32 %v1585, %v1586
  %v1588 = vrot.slane %v1587, 4
  %v1589 = vadd.f32 %v1587, %v1588
  %v1590 = vrot.slane %v1589, 2
  %v1591 = vadd.f32 %v1589, %v1590
  %v1592 = vrot.slane %v1591, 1
  %v1593 = vadd.f32 %v1591, %v1592
  %v1594 = vmul.f32 %v1593, 0.02
  %v1595 = vld [vmem:[%s7 + $0x2] sm:$0x1]
  %v1596 = vadd.f32 %v1594, 1e-05
  %v1597 = vrsqrt.pop %v1596
  %v1598 = vmul.f32 %v1595, %v1597
  %v1599 = vlaneseq
  %v1600 = vshrl.u32 %v1599, 7
  %v1601 = vsub.s32 0, %v1600
  %v1602 = vrot.slane %v1598, %v1601
  %v1603 = vmul.f32 %v1549, %v1602
  %v1604 = vmul.f32 %v1550, %v1602
  %v1605 = vmul.f32 %v1551, %v1602
  %v1606 = vmul.f32 %v1552, %v1602
  %v1607 = vmul.f32 %v1553, %v1602
  %v1608 = vmul.f32 %v1554, %v1602
  %v1609 = vmul.f32 %v1555, %v1602
  %v1610 = vmul.f32 %v1556, %v1602
  %v1611 = vld [vmem:[%s7 + $0x3] sm:$0x1]
  %v1612 = vlaneseq
  %v1613 = vshrl.u32 %v1612, 7
  %v1614 = vsub.s32 0, %v1613
  %v1615 = vrot.slane %v1611, %v1614
  %v1616 = vadd.f32 %v1603, %v1615
  %v1617 = vadd.f32 %v1604, %v1615
  %v1618 = vadd.f32 %v1605, %v1615
  %v1619 = vadd.f32 %v1606, %v1615
  %v1620 = vadd.f32 %v1607, %v1615
  %v1621 = vadd.f32 %v1608, %v1615
  %v1622 = vadd.f32 %v1609, %v1615
  %v1623 = vadd.f32 %v1610, %v1615
  %vm1624 = vcmp.ge.f32.partialorder %v1616, 0.0
  %vm1625 = vcmp.ge.f32.partialorder %v1617, 0.0
  %vm1626 = vcmp.ge.f32.partialorder %v1618, 0.0
  %vm1627 = vcmp.ge.f32.partialorder %v1619, 0.0
  %vm1628 = vcmp.ge.f32.partialorder %v1620, 0.0
  %vm1629 = vcmp.ge.f32.partialorder %v1621, 0.0
  %vm1630 = vcmp.ge.f32.partialorder %v1622, 0.0
  %vm1631 = vcmp.ge.f32.partialorder %v1623, 0.0
  %v1632 = vmul.f32 %v1616, 0.2
  %v1633 = vmul.f32 %v1617, 0.2
  %v1634 = vmul.f32 %v1618, 0.2
  %v1635 = vmul.f32 %v1619, 0.2
  %v1636 = vmul.f32 %v1620, 0.2
  %v1637 = vmul.f32 %v1621, 0.2
  %v1638 = vmul.f32 %v1622, 0.2
  %v1639 = vmul.f32 %v1623, 0.2
  %v1640 = vsel %vm1624, %v1616, %v1632
  %v1641 = vsel %vm1625, %v1617, %v1633
  %v1642 = vsel %vm1626, %v1618, %v1634
  %v1643 = vsel %vm1627, %v1619, %v1635
  %v1644 = vsel %vm1628, %v1620, %v1636
  %v1645 = vsel %vm1629, %v1621, %v1637
  %v1646 = vsel %vm1630, %v1622, %v1638
  %v1647 = vsel %vm1631, %v1623, %v1639
  %v1648 = vld [vmem:[%s6] sm:$0xff]
  %v1649 = vld [vmem:[%s6 + $0x8] sm:$0xff]
  %v1650 = vld [vmem:[%s6 + $0x10] sm:$0xff]
  %v1651 = vld [vmem:[%s6 + $0x18] sm:$0xff]
  %v1652 = vld [vmem:[%s6 + $0x20] sm:$0xff]
  %v1653 = vld [vmem:[%s6 + $0x28] sm:$0xff]
  %v1654 = vld [vmem:[%s6 + $0x30] sm:$0xff]
  %v1655 = vld [vmem:[%s6 + $0x38] sm:$0xff]
  %v1656 = vmul.f32 %v1640, %v1648
  %v1657 = vmul.f32 %v1641, %v1649
  %v1658 = vmul.f32 %v1642, %v1650
  %v1659 = vmul.f32 %v1643, %v1651
  %v1660 = vmul.f32 %v1644, %v1652
  %v1661 = vmul.f32 %v1645, %v1653
  %v1662 = vmul.f32 %v1646, %v1654
  %v1663 = vmul.f32 %v1647, %v1655
  %v1664 = vsel %vm1526, %v1656, 0.0
  %1665 = vadd.xlane.f32.xlu0 %v1664
  %v1666 = vpop.xlane.xlu0 %1665
  %v1667 = vsel %vm1526, %v1657, 0.0
  %1668 = vadd.xlane.f32.xlu0 %v1667
  %v1669 = vpop.xlane.xlu0 %1668
  %v1670 = vsel %vm1526, %v1658, 0.0
  %1671 = vadd.xlane.f32.xlu0 %v1670
  %v1672 = vpop.xlane.xlu0 %1671
  %v1673 = vsel %vm1526, %v1659, 0.0
  %1674 = vadd.xlane.f32.xlu0 %v1673
  %v1675 = vpop.xlane.xlu0 %1674
  %v1676 = vsel %vm1526, %v1660, 0.0
  %1677 = vadd.xlane.f32.xlu0 %v1676
  %v1678 = vpop.xlane.xlu0 %1677
  %v1679 = vsel %vm1526, %v1661, 0.0
  %1680 = vadd.xlane.f32.xlu0 %v1679
  %v1681 = vpop.xlane.xlu0 %1680
  %v1682 = vsel %vm1526, %v1662, 0.0
  %1683 = vadd.xlane.f32.xlu0 %v1682
  %v1684 = vpop.xlane.xlu0 %1683
  %v1685 = vsel %vm1526, %v1663, 0.0
  %1686 = vadd.xlane.f32.xlu0 %v1685
  %v1687 = vpop.xlane.xlu0 %1686
  %v1696 = vlaneseq
  %v1697 = vand.u32 %v1696, 127
  %v1698 = vlaneseq
  %v1699 = vshrl.u32 %v1698, 7
  %v1700 = vsub.s32 %v1697, %v1699
  %v1701 = vrot.slane %v1666, %v1700
  %v1702 = vadd.s32 %v1697, 4294967288
  %v1703 = vlaneseq
  %v1704 = vshrl.u32 %v1703, 7
  %v1705 = vsub.s32 %v1702, %v1704
  %v1706 = vrot.slane %v1669, %v1705
  %vm1707 = vcmask 130112
  %v1708 = vsel %vm1707, %v1706, %v1701
  %v1709 = vadd.s32 %v1697, 4294967280
  %v1710 = vlaneseq
  %v1711 = vshrl.u32 %v1710, 7
  %v1712 = vsub.s32 %v1709, %v1711
  %v1713 = vrot.slane %v1672, %v1712
  %vm1714 = vcmask 195712
  %v1715 = vsel %vm1714, %v1713, %v1708
  %v1716 = vadd.s32 %v1697, 4294967272
  %v1717 = vlaneseq
  %v1718 = vshrl.u32 %v1717, 7
  %v1719 = vsub.s32 %v1716, %v1718
  %v1720 = vrot.slane %v1675, %v1719
  %vm1721 = vcmask 261312
  %v1722 = vsel %vm1721, %v1720, %v1715
  %v1723 = vlaneseq
  %v1724 = vshrl.u32 %v1723, 7
  %v1725 = vsub.s32 %v1697, %v1724
  %v1726 = vrot.slane %v1678, %v1725
  %v1727 = vlaneseq
  %v1728 = vshrl.u32 %v1727, 7
  %v1729 = vsub.s32 %v1702, %v1728
  %v1730 = vrot.slane %v1681, %v1729
  %v1731 = vsel %vm1707, %v1730, %v1726
  %v1732 = vlaneseq
  %v1733 = vshrl.u32 %v1732, 7
  %v1734 = vsub.s32 %v1709, %v1733
  %v1735 = vrot.slane %v1684, %v1734
  %v1736 = vsel %vm1714, %v1735, %v1731
  %v1737 = vlaneseq
  %v1738 = vshrl.u32 %v1737, 7
  %v1739 = vsub.s32 %v1716, %v1738
  %v1740 = vrot.slane %v1687, %v1739
  %v1741 = vsel %vm1721, %v1740, %v1736
  %vm1742 = vcmask 1041409
  %v1743 = vsel %vm1742, %v1741, %v1722
  %vm1745 = vcmask 254976
  %v1746 = vsel %vm1745, %v1743, 0.0
  %1747 = vadd.xlane.f32.xlu0 %v1746
  %v1748 = vpop.xlane.xlu0 %1747
  %v1749 = vld [vmem:[%s7 + $0x4] sm:$0x1]
  %v1750 = vlaneseq
  %v1751 = vshrl.u32 %v1750, 7
  %v1752 = vsub.s32 0, %v1751
  %v1753 = vrot.slane %v1749, %v1752
  %v1754 = vadd.f32 %v1748, %v1753
  %vm1755 = vcmask 1024
  %1756 = vst.msk [vmem:[%s8] sm:$0x3] %vm1755, %v1754
  // Predicated region
  $region34: #{discriminator_forward.1} parent=0 // pred_check
    _
  $region35: #{discriminator_forward.1} parent=0 // pred_check_branch
    %1758 = sbr.rel (0) target = $region37
  $region36: #{discriminator_forward.1} parent=0 // pred_region
    _
  $region37: #{discriminator_forward.1} parent=0 // pred_fallthru
    _
  // Predicated region
  $region38: #{discriminator_forward.1} parent=0 // pred_check
    _
  $region39: #{discriminator_forward.1} parent=0 // pred_check_branch
    %1760 = sbr.rel (0) target = $region41
  $region40: #{discriminator_forward.1} parent=0 // pred_region
    _
  $region41: #{discriminator_forward.1} parent=0 // pred_fallthru
    _

</llo_original>
